<compile_context>
chip_gen: v5e
topology: v5e:2x2
jax: 0.10.0
libtpu: 0.0.40
codegen_flags: <defaults>
</compile_context>

<pallas_src>
import functools

import jax
import jax.numpy as jnp
from jax.experimental import pallas as pl
from jax.experimental.pallas import tpu as pltpu

_VMEM_LIMIT = 48 * 1024 * 1024  # < v7x's 64 MiB physical VMEM, > 32 MiB default


def _round_up(v, m):
    return ((v + m - 1) // m) * m


def _full_spec(arr):
    """Whole-array block (weights are tiny and layer-stacked)."""
    nd = arr.ndim
    return pl.BlockSpec(arr.shape, lambda n, _nd=nd: (0,) * _nd)


def _conv1x1_mm(w):
    # PyTorch Conv1d weight (Cout, Cin, 1) -> matmul form (Cin, Cout)
    return jnp.transpose(w[:, :, 0], (1, 0))


def _dilconv_mm(w):
    # PyTorch Conv1d weight (Cout, Cin, 3) -> (3, Cin, Cout)
    return jnp.transpose(w, (2, 1, 0))


# ---------------------------------------------------------------------------
# Kernels
# ---------------------------------------------------------------------------
def _dilated_conv(fpad_ref, f, wd, bd, *, dilation, halo):
    """3-tap dilated conv as three MXU matmuls.

    `fpad_ref` holds `f` with `halo` zero rows on each side; the shifted
    operands are plain pl.ds loads from it (no concatenate / roll copies).
    """
    T = f.shape[0]
    x_left = fpad_ref[pl.ds(halo - dilation, T), :]   # f[t - d] (0 outside)
    x_right = fpad_ref[pl.ds(halo + dilation, T), :]  # f[t + d] (0 outside)
    return (
        jnp.dot(x_left, wd[0], preferred_element_type=jnp.float32)
        + jnp.dot(f, wd[1], preferred_element_type=jnp.float32)
        + jnp.dot(x_right, wd[2], preferred_element_type=jnp.float32)
        + bd
    )


def _pg_kernel(x_ref, win_ref, bin_ref, wd1_ref, bd1_ref, wd2_ref, bd2_ref,
               wf_ref, bf_ref, wout_ref, bout_ref, o_ref, fpad_ref,
               *, dil1, dil2, halo):
    """Fused Prediction_Generation stage for one batch element."""
    T = x_ref.shape[1]
    x = x_ref[0].astype(jnp.float32)                        # (T, dim)

    # Zero the halo'd scratch once; halo rows stay zero for every layer.
    fpad_ref[...] = jnp.zeros_like(fpad_ref)

    # conv_1x1_in
    f = jnp.dot(x, win_ref[...], preferred_element_type=jnp.float32) + bin_ref[...]

    for i in range(len(dil1)):
        fpad_ref[pl.ds(halo, T), :] = f
        wd1 = wd1_ref[i]                                    # (3, C, C)
        wd2 = wd2_ref[i]                                    # (3, C, C)
        wf = wf_ref[i]                                      # (2, C, C) split fusion weight
        a = _dilated_conv(fpad_ref, f, wd1, bd1_ref[i], dilation=dil1[i], halo=halo)
        b = _dilated_conv(fpad_ref, f, wd2, bd2_ref[i], dilation=dil2[i], halo=halo)
        # conv_fusion on cat([a, b]) == a @ wf[0] + b @ wf[1]  (no concat needed)
        g = (jnp.dot(a, wf[0], preferred_element_type=jnp.float32)
             + jnp.dot(b, wf[1], preferred_element_type=jnp.float32)
             + bf_ref[i])
        g = jnp.maximum(g, 0.0)                             # ReLU
        # dropout: eval-mode identity
        f = f + g                                           # residual

    out = jnp.dot(f, wout_ref[...], preferred_element_type=jnp.float32) + bout_ref[...]
    o_ref[0] = out.astype(o_ref.dtype)


def _refinement_kernel(x_ref, win_ref, bin_ref, wd_ref, bd_ref, w1_ref, b1_ref,
                       wout_ref, bout_ref, o_ref, fpad_ref,
                       *, dilations, halo, softmax_input):
    """Fused Refinement stage (softmax -> 1x1 -> DilatedResidual* -> 1x1)."""
    T = x_ref.shape[1]
    x = x_ref[0].astype(jnp.float32)                        # (T, num_classes)

    if softmax_input:
        # F.softmax(out, dim=1) fused into the stage input (channel = lane axis).
        m = jnp.max(x, axis=-1, keepdims=True)
        e = jnp.exp(x - m)
        x = e / jnp.sum(e, axis=-1, keepdims=True)

    fpad_ref[...] = jnp.zeros_like(fpad_ref)

    # conv_1x1 (stage input)
    f = jnp.dot(x, win_ref[...], preferred_element_type=jnp.float32) + bin_ref[...]

    for i, d in enumerate(dilations):
        fpad_ref[pl.ds(halo, T), :] = f
        out = _dilated_conv(fpad_ref, f, wd_ref[i], bd_ref[i], dilation=d, halo=halo)
        out = jnp.maximum(out, 0.0)                         # ReLU
        out = jnp.dot(out, w1_ref[i], preferred_element_type=jnp.float32) + b1_ref[i]
        # dropout: eval-mode identity
        f = f + out                                         # residual

    y = jnp.dot(f, wout_ref[...], preferred_element_type=jnp.float32) + bout_ref[...]
    o_ref[0] = y.astype(o_ref.dtype)


# ---------------------------------------------------------------------------
# Stage wrappers (channels-last (N, T, C) in / out)
# ---------------------------------------------------------------------------
def pg_forward(x_ntc, p, num_layers):
    N, T, dim = x_ntc.shape
    C = p["w_in"].shape[0]
    num_classes = p["w_out"].shape[0]
    dil1 = tuple(2 ** (num_layers - 1 - i) for i in range(num_layers))
    dil2 = tuple(2 ** i for i in range(num_layers))
    halo = _round_up(max(dil1 + dil2), 8)

    w_in = _conv1x1_mm(p["w_in"]); b_in = p["b_in"].reshape(1, C)
    wd1 = jnp.stack([_dilconv_mm(w) for w in p["wd1"]])          # (L, 3, C, C)
    bd1 = jnp.stack([b.reshape(1, C) for b in p["bd1"]])         # (L, 1, C)
    wd2 = jnp.stack([_dilconv_mm(w) for w in p["wd2"]])
    bd2 = jnp.stack([b.reshape(1, C) for b in p["bd2"]])
    wf = jnp.stack([_conv1x1_mm(w).reshape(2, C, C) for w in p["wf"]])  # (L, 2, C, C)
    bf = jnp.stack([b.reshape(1, C) for b in p["bf"]])
    w_out = _conv1x1_mm(p["w_out"]); b_out = p["b_out"].reshape(1, num_classes)

    args = (w_in, b_in, wd1, bd1, wd2, bd2, wf, bf, w_out, b_out)
    kernel = functools.partial(_pg_kernel, dil1=dil1, dil2=dil2, halo=halo)
    return pl.pallas_call(
        kernel,
        out_shape=jax.ShapeDtypeStruct((N, T, num_classes), x_ntc.dtype),
        grid=(N,),
        in_specs=[pl.BlockSpec((1, T, dim), lambda n: (n, 0, 0))]
                 + [_full_spec(a) for a in args],
        out_specs=pl.BlockSpec((1, T, num_classes), lambda n: (n, 0, 0)),
        scratch_shapes=[pltpu.VMEM((T + 2 * halo, C), jnp.float32)],
        compiler_params=pltpu.CompilerParams(
            dimension_semantics=("parallel",),
            vmem_limit_bytes=_VMEM_LIMIT),
    )(x_ntc, *args)


def refinement_forward(x_ntc, p, num_layers, *, softmax_input):
    N, T, in_dim = x_ntc.shape
    C = p["w_in"].shape[0]
    num_classes = p["w_out"].shape[0]
    dilations = tuple(2 ** i for i in range(num_layers))
    halo = _round_up(max(dilations), 8)

    w_in = _conv1x1_mm(p["w_in"]); b_in = p["b_in"].reshape(1, C)
    wd = jnp.stack([_dilconv_mm(w) for w in p["wd"]])            # (L, 3, C, C)
    bd = jnp.stack([b.reshape(1, C) for b in p["bd"]])
    w1 = jnp.stack([_conv1x1_mm(w) for w in p["w1"]])            # (L, C, C)
    b1 = jnp.stack([b.reshape(1, C) for b in p["b1"]])
    w_out = _conv1x1_mm(p["w_out"]); b_out = p["b_out"].reshape(1, num_classes)

    args = (w_in, b_in, wd, bd, w1, b1, w_out, b_out)
    kernel = functools.partial(_refinement_kernel, dilations=dilations,
                               halo=halo, softmax_input=softmax_input)
    return pl.pallas_call(
        kernel,
        out_shape=jax.ShapeDtypeStruct((N, T, num_classes), x_ntc.dtype),
        grid=(N,),
        in_specs=[pl.BlockSpec((1, T, in_dim), lambda n: (n, 0, 0))]
                 + [_full_spec(a) for a in args],
        out_specs=pl.BlockSpec((1, T, num_classes), lambda n: (n, 0, 0)),
        scratch_shapes=[pltpu.VMEM((T + 2 * halo, C), jnp.float32)],
        compiler_params=pltpu.CompilerParams(
            dimension_semantics=("parallel",),
            vmem_limit_bytes=_VMEM_LIMIT),
    )(x_ntc, *args)


def ms_tcn2_forward(x_nct, params):
    """Full MS_TCN2 forward. x_nct: (N, dim, T) PyTorch layout.

    Returns (num_R + 1, N, num_classes, T), matching the PyTorch module.
    """
    x = jnp.transpose(x_nct, (0, 2, 1))                     # entry transpose (once)
    out = pg_forward(x, params["PG"], params["num_layers_PG"])
    stage_outs = [out]
    for rp in params["Rs"]:
        out = refinement_forward(out, rp, params["num_layers_R"], softmax_input=True)
        stage_outs.append(out)
    y = jnp.stack(stage_outs, axis=0)                       # (S, N, T, K)
    return jnp.transpose(y, (0, 1, 3, 2))                   # exit transpose (once)


# ---------------------------------------------------------------------------
# Pure-JAX reference (PyTorch NCW semantics) and parameter init
# ---------------------------------------------------------------------------
def _conv1d_ref(x, w, b, dilation=1, padding=0):
    dn = ("NCH", "OIH", "NCH")
    out = jax.lax.conv_general_dilated(
        x, w, window_strides=(1,), padding=[(padding, padding)],
        rhs_dilation=(dilation,), dimension_numbers=dn)
    return out + b[None, :, None]


def _pg_reference(x, p, L):
    f = _conv1d_ref(x, p["w_in"], p["b_in"])
    for i in range(L):
        d1, d2 = 2 ** (L - 1 - i), 2 ** i
        a = _conv1d_ref(f, p["wd1"][i], p["bd1"][i], dilation=d1, padding=d1)
        b = _conv1d_ref(f, p["wd2"][i], p["bd2"][i], dilation=d2, padding=d2)
        g = _conv1d_ref(jnp.concatenate([a, b], axis=1), p["wf"][i], p["bf"][i])
        f = f + jax.nn.relu(g)
    return _conv1d_ref(f, p["w_out"], p["b_out"])


def _refinement_reference(x, p, L):
    f = _conv1d_ref(x, p["w_in"], p["b_in"])
    for i in range(L):
        d = 2 ** i
        o = jax.nn.relu(_conv1d_ref(f, p["wd"][i], p["bd"][i], dilation=d, padding=d))
        o = _conv1d_ref(o, p["w1"][i], p["b1"][i])
        f = f + o
    return _conv1d_ref(f, p["w_out"], p["b_out"])


def ms_tcn2_reference(x, params):
    out = _pg_reference(x, params["PG"], params["num_layers_PG"])
    outs = [out]
    for rp in params["Rs"]:
        out = _refinement_reference(jax.nn.softmax(out, axis=1), rp,
                                    params["num_layers_R"])
        outs.append(out)
    return jnp.stack(outs, axis=0)


def init_params(key, num_layers_PG, num_layers_R, num_R, num_f_maps, dim, num_classes):
    keys = iter(jax.random.split(key, 256))

    def nrm(shape, scale=0.1):
        return scale * jax.random.normal(next(keys), shape, dtype=jnp.float32)

    C = num_f_maps
    pg = dict(
        w_in=nrm((C, dim, 1)), b_in=nrm((C,)),
        wd1=[nrm((C, C, 3)) for _ in range(num_layers_PG)],
        bd1=[nrm((C,)) for _ in range(num_layers_PG)],
        wd2=[nrm((C, C, 3)) for _ in range(num_layers_PG)],
        bd2=[nrm((C,)) for _ in range(num_layers_PG)],
        wf=[nrm((C, 2 * C, 1)) for _ in range(num_layers_PG)],
        bf=[nrm((C,)) for _ in range(num_layers_PG)],
        w_out=nrm((num_classes, C, 1)), b_out=nrm((num_classes,)),
    )
    rs = []
    for _ in range(num_R):
        rs.append(dict(
            w_in=nrm((C, num_classes, 1)), b_in=nrm((C,)),
            wd=[nrm((C, C, 3)) for _ in range(num_layers_R)],
            bd=[nrm((C,)) for _ in range(num_layers_R)],
            w1=[nrm((C, C, 1)) for _ in range(num_layers_R)],
            b1=[nrm((C,)) for _ in range(num_layers_R)],
            w_out=nrm((num_classes, C, 1)), b_out=nrm((num_classes,)),
        ))
    return dict(PG=pg, Rs=rs,
                num_layers_PG=num_layers_PG, num_layers_R=num_layers_R)


if __name__ == "__main__":
    # Small shapes consistent with MS_TCN2 (batch, input dim, time).
    N, dim, T = 2, 16, 32
    num_f_maps, num_classes = 8, 8
    num_layers_PG, num_layers_R, num_R = 4, 3, 2

    key = jax.random.PRNGKey(0)
    k_x, k_p = jax.random.split(key)
    x = jax.random.normal(k_x, (N, dim, T), dtype=jnp.float32)
    params = init_params(k_p, num_layers_PG, num_layers_R, num_R,
                         num_f_maps, dim, num_classes)

    y = ms_tcn2_forward(x, params)
    y = jax.block_until_ready(y)

    y_ref = ms_tcn2_reference(x, params)
    assert y.shape == (num_R + 1, N, num_classes, T), y.shape
    assert jnp.allclose(y, y_ref, atol=1e-4, rtol=1e-4), \
        float(jnp.max(jnp.abs(y - y_ref)))

    print("KERNEL_OK")
</pallas_src>

<mosaic_0001>
module attributes {stable_mosaic.version = 11 : i64} {
  func.func @_pg_kernel(%arg0: i32, %arg1: memref<1x32x16xf32, #tpu.memory_space<vmem>>, %arg2: memref<16x8xf32, #tpu.memory_space<vmem>>, %arg3: memref<1x8xf32, #tpu.memory_space<vmem>>, %arg4: memref<4x3x8x8xf32, #tpu.memory_space<vmem>>, %arg5: memref<4x1x8xf32, #tpu.memory_space<vmem>>, %arg6: memref<4x3x8x8xf32, #tpu.memory_space<vmem>>, %arg7: memref<4x1x8xf32, #tpu.memory_space<vmem>>, %arg8: memref<4x2x8x8xf32, #tpu.memory_space<vmem>>, %arg9: memref<4x1x8xf32, #tpu.memory_space<vmem>>, %arg10: memref<8x8xf32, #tpu.memory_space<vmem>>, %arg11: memref<1x8xf32, #tpu.memory_space<vmem>>, %arg12: memref<1x32x8xf32, #tpu.memory_space<vmem>>, %arg13: memref<48x8xf32, #tpu.memory_space<vmem>>) attributes {dimension_semantics = [#tpu.dimension_semantics<parallel>], iteration_bounds = array<i64: 2>, scalar_prefetch = 0 : i64, scratch_operands = 1 : i64, tpu.core_type = #tpu.core_type<tc>, window_params = [{transform_indices = @transform_0, window_bounds = array<i64: 1, 32, 16>}, {pipeline_mode = #tpu.pipeline_mode<synchronous>, transform_indices = @transform_1, window_bounds = array<i64: 16, 8>}, {pipeline_mode = #tpu.pipeline_mode<synchronous>, transform_indices = @transform_2, window_bounds = array<i64: 1, 8>}, {pipeline_mode = #tpu.pipeline_mode<synchronous>, transform_indices = @transform_3, window_bounds = array<i64: 4, 3, 8, 8>}, {pipeline_mode = #tpu.pipeline_mode<synchronous>, transform_indices = @transform_4, window_bounds = array<i64: 4, 1, 8>}, {pipeline_mode = #tpu.pipeline_mode<synchronous>, transform_indices = @transform_5, window_bounds = array<i64: 4, 3, 8, 8>}, {pipeline_mode = #tpu.pipeline_mode<synchronous>, transform_indices = @transform_6, window_bounds = array<i64: 4, 1, 8>}, {pipeline_mode = #tpu.pipeline_mode<synchronous>, transform_indices = @transform_7, window_bounds = array<i64: 4, 2, 8, 8>}, {pipeline_mode = #tpu.pipeline_mode<synchronous>, transform_indices = @transform_8, window_bounds = array<i64: 4, 1, 8>}, {pipeline_mode = #tpu.pipeline_mode<synchronous>, transform_indices = @transform_9, window_bounds = array<i64: 8, 8>}, {pipeline_mode = #tpu.pipeline_mode<synchronous>, transform_indices = @transform_10, window_bounds = array<i64: 1, 8>}, {transform_indices = @transform_11, window_bounds = array<i64: 1, 32, 8>}]} {
    %c0 = arith.constant 0 : index
    %c0_0 = arith.constant 0 : index
    %c0_1 = arith.constant 0 : index
    %0 = vector.load %arg1[%c0, %c0_0, %c0_1] : memref<1x32x16xf32, #tpu.memory_space<vmem>>, vector<1x32x16xf32>
    %1 = vector.shape_cast %0 : vector<1x32x16xf32> to vector<32x16xf32>
    %cst = arith.constant 0.000000e+00 : f32
    %2 = vector.broadcast %cst : f32 to vector<48x8xf32>
    %c0_2 = arith.constant 0 : index
    %c0_3 = arith.constant 0 : index
    %3 = vector.load %arg13[%c0_2, %c0_3] : memref<48x8xf32, #tpu.memory_space<vmem>>, vector<48x8xf32>
    tpu.vector_store %arg13[%c0_2, %c0_3], %2 {strides = array<i32>} : memref<48x8xf32, #tpu.memory_space<vmem>>, vector<48x8xf32>,
    %c0_4 = arith.constant 0 : index
    %c0_5 = arith.constant 0 : index
    %4 = vector.load %arg2[%c0_4, %c0_5] : memref<16x8xf32, #tpu.memory_space<vmem>>, vector<16x8xf32>
    %cst_6 = arith.constant dense<0.000000e+00> : vector<32x8xf32>
    %5 = tpu.matmul %1, %4, %cst_6 {dimension_numbers = #tpu.dot_dimension_numbers<[1], [0], [0], [1], [0, 0, 1, 1], [], []>} : vector<32x16xf32>, vector<16x8xf32>, vector<32x8xf32> -> vector<32x8xf32>
    %c0_7 = arith.constant 0 : index
    %c0_8 = arith.constant 0 : index
    %6 = vector.load %arg3[%c0_7, %c0_8] : memref<1x8xf32, #tpu.memory_space<vmem>>, vector<1x8xf32>
    %7 = vector.broadcast %6 : vector<1x8xf32> to vector<32x8xf32>
    %8 = arith.addf %5, %7 : vector<32x8xf32>
    %c8 = arith.constant 8 : index
    %c0_9 = arith.constant 0 : index
    %9 = vector.load %arg13[%c8, %c0_9] : memref<48x8xf32, #tpu.memory_space<vmem>>, vector<32x8xf32>
    tpu.vector_store %arg13[%c8, %c0_9], %8 {strides = array<i32>} : memref<48x8xf32, #tpu.memory_space<vmem>>, vector<32x8xf32>,
    %c0_10 = arith.constant 0 : index
    %c0_11 = arith.constant 0 : index
    %c0_12 = arith.constant 0 : index
    %c0_13 = arith.constant 0 : index
    %10 = vector.load %arg4[%c0_10, %c0_11, %c0_12, %c0_13] : memref<4x3x8x8xf32, #tpu.memory_space<vmem>>, vector<1x3x8x8xf32>
    %11 = vector.shape_cast %10 : vector<1x3x8x8xf32> to vector<3x8x8xf32>
    %c0_14 = arith.constant 0 : index
    %c0_15 = arith.constant 0 : index
    %c0_16 = arith.constant 0 : index
    %c0_17 = arith.constant 0 : index
    %12 = vector.load %arg6[%c0_14, %c0_15, %c0_16, %c0_17] : memref<4x3x8x8xf32, #tpu.memory_space<vmem>>, vector<1x3x8x8xf32>
    %13 = vector.shape_cast %12 : vector<1x3x8x8xf32> to vector<3x8x8xf32>
    %c0_18 = arith.constant 0 : index
    %c0_19 = arith.constant 0 : index
    %c0_20 = arith.constant 0 : index
    %c0_21 = arith.constant 0 : index
    %14 = vector.load %arg8[%c0_18, %c0_19, %c0_20, %c0_21] : memref<4x2x8x8xf32, #tpu.memory_space<vmem>>, vector<1x2x8x8xf32>
    %15 = vector.shape_cast %14 : vector<1x2x8x8xf32> to vector<2x8x8xf32>
    %c0_22 = arith.constant 0 : index
    %c0_23 = arith.constant 0 : index
    %c0_24 = arith.constant 0 : index
    %16 = vector.load %arg5[%c0_22, %c0_23, %c0_24] : memref<4x1x8xf32, #tpu.memory_space<vmem>>, vector<1x1x8xf32>
    %17 = vector.shape_cast %16 : vector<1x1x8xf32> to vector<1x8xf32>
    %c0_25 = arith.constant 0 : index
    %c0_26 = arith.constant 0 : index
    %18 = vector.load %arg13[%c0_25, %c0_26] : memref<48x8xf32, #tpu.memory_space<vmem>>, vector<32x8xf32>
    %c16 = arith.constant 16 : index
    %c0_27 = arith.constant 0 : index
    %19 = vector.load %arg13[%c16, %c0_27] : memref<48x8xf32, #tpu.memory_space<vmem>>, vector<32x8xf32>
    %20 = vector.extract_strided_slice %11 {offsets = [0, 0, 0], sizes = [1, 8, 8], strides = [1, 1, 1]} : vector<3x8x8xf32> to vector<1x8x8xf32>
    %21 = vector.shape_cast %20 : vector<1x8x8xf32> to vector<8x8xf32>
    %cst_28 = arith.constant dense<0.000000e+00> : vector<32x8xf32>
    %22 = tpu.matmul %18, %21, %cst_28 {dimension_numbers = #tpu.dot_dimension_numbers<[1], [0], [0], [1], [0, 0, 1, 1], [], []>} : vector<32x8xf32>, vector<8x8xf32>, vector<32x8xf32> -> vector<32x8xf32>
    %23 = vector.extract_strided_slice %11 {offsets = [1, 0, 0], sizes = [1, 8, 8], strides = [1, 1, 1]} : vector<3x8x8xf32> to vector<1x8x8xf32>
    %24 = vector.shape_cast %23 : vector<1x8x8xf32> to vector<8x8xf32>
    %cst_29 = arith.constant dense<0.000000e+00> : vector<32x8xf32>
    %25 = tpu.matmul %8, %24, %cst_29 {dimension_numbers = #tpu.dot_dimension_numbers<[1], [0], [0], [1], [0, 0, 1, 1], [], []>} : vector<32x8xf32>, vector<8x8xf32>, vector<32x8xf32> -> vector<32x8xf32>
    %26 = arith.addf %22, %25 : vector<32x8xf32>
    %27 = vector.extract_strided_slice %11 {offsets = [2, 0, 0], sizes = [1, 8, 8], strides = [1, 1, 1]} : vector<3x8x8xf32> to vector<1x8x8xf32>
    %28 = vector.shape_cast %27 : vector<1x8x8xf32> to vector<8x8xf32>
    %cst_30 = arith.constant dense<0.000000e+00> : vector<32x8xf32>
    %29 = tpu.matmul %19, %28, %cst_30 {dimension_numbers = #tpu.dot_dimension_numbers<[1], [0], [0], [1], [0, 0, 1, 1], [], []>} : vector<32x8xf32>, vector<8x8xf32>, vector<32x8xf32> -> vector<32x8xf32>
    %30 = arith.addf %26, %29 : vector<32x8xf32>
    %31 = vector.broadcast %17 : vector<1x8xf32> to vector<32x8xf32>
    %32 = arith.addf %30, %31 : vector<32x8xf32>
    %c0_31 = arith.constant 0 : index
    %c0_32 = arith.constant 0 : index
    %c0_33 = arith.constant 0 : index
    %33 = vector.load %arg7[%c0_31, %c0_32, %c0_33] : memref<4x1x8xf32, #tpu.memory_space<vmem>>, vector<1x1x8xf32>
    %34 = vector.shape_cast %33 : vector<1x1x8xf32> to vector<1x8xf32>
    %c7 = arith.constant 7 : index
    %c0_34 = arith.constant 0 : index
    %35 = vector.load %arg13[%c7, %c0_34] : memref<48x8xf32, #tpu.memory_space<vmem>>, vector<32x8xf32>
    %c9 = arith.constant 9 : index
    %c0_35 = arith.constant 0 : index
    %36 = vector.load %arg13[%c9, %c0_35] : memref<48x8xf32, #tpu.memory_space<vmem>>, vector<32x8xf32>
    %37 = vector.extract_strided_slice %13 {offsets = [0, 0, 0], sizes = [1, 8, 8], strides = [1, 1, 1]} : vector<3x8x8xf32> to vector<1x8x8xf32>
    %38 = vector.shape_cast %37 : vector<1x8x8xf32> to vector<8x8xf32>
    %cst_36 = arith.constant dense<0.000000e+00> : vector<32x8xf32>
    %39 = tpu.matmul %35, %38, %cst_36 {dimension_numbers = #tpu.dot_dimension_numbers<[1], [0], [0], [1], [0, 0, 1, 1], [], []>} : vector<32x8xf32>, vector<8x8xf32>, vector<32x8xf32> -> vector<32x8xf32>
    %40 = vector.extract_strided_slice %13 {offsets = [1, 0, 0], sizes = [1, 8, 8], strides = [1, 1, 1]} : vector<3x8x8xf32> to vector<1x8x8xf32>
    %41 = vector.shape_cast %40 : vector<1x8x8xf32> to vector<8x8xf32>
    %cst_37 = arith.constant dense<0.000000e+00> : vector<32x8xf32>
    %42 = tpu.matmul %8, %41, %cst_37 {dimension_numbers = #tpu.dot_dimension_numbers<[1], [0], [0], [1], [0, 0, 1, 1], [], []>} : vector<32x8xf32>, vector<8x8xf32>, vector<32x8xf32> -> vector<32x8xf32>
    %43 = arith.addf %39, %42 : vector<32x8xf32>
    %44 = vector.extract_strided_slice %13 {offsets = [2, 0, 0], sizes = [1, 8, 8], strides = [1, 1, 1]} : vector<3x8x8xf32> to vector<1x8x8xf32>
    %45 = vector.shape_cast %44 : vector<1x8x8xf32> to vector<8x8xf32>
    %cst_38 = arith.constant dense<0.000000e+00> : vector<32x8xf32>
    %46 = tpu.matmul %36, %45, %cst_38 {dimension_numbers = #tpu.dot_dimension_numbers<[1], [0], [0], [1], [0, 0, 1, 1], [], []>} : vector<32x8xf32>, vector<8x8xf32>, vector<32x8xf32> -> vector<32x8xf32>
    %47 = arith.addf %43, %46 : vector<32x8xf32>
    %48 = vector.broadcast %34 : vector<1x8xf32> to vector<32x8xf32>
    %49 = arith.addf %47, %48 : vector<32x8xf32>
    %50 = vector.extract_strided_slice %15 {offsets = [0, 0, 0], sizes = [1, 8, 8], strides = [1, 1, 1]} : vector<2x8x8xf32> to vector<1x8x8xf32>
    %51 = vector.shape_cast %50 : vector<1x8x8xf32> to vector<8x8xf32>
    %cst_39 = arith.constant dense<0.000000e+00> : vector<32x8xf32>
    %52 = tpu.matmul %32, %51, %cst_39 {dimension_numbers = #tpu.dot_dimension_numbers<[1], [0], [0], [1], [0, 0, 1, 1], [], []>} : vector<32x8xf32>, vector<8x8xf32>, vector<32x8xf32> -> vector<32x8xf32>
    %53 = vector.extract_strided_slice %15 {offsets = [1, 0, 0], sizes = [1, 8, 8], strides = [1, 1, 1]} : vector<2x8x8xf32> to vector<1x8x8xf32>
    %54 = vector.shape_cast %53 : vector<1x8x8xf32> to vector<8x8xf32>
    %cst_40 = arith.constant dense<0.000000e+00> : vector<32x8xf32>
    %55 = tpu.matmul %49, %54, %cst_40 {dimension_numbers = #tpu.dot_dimension_numbers<[1], [0], [0], [1], [0, 0, 1, 1], [], []>} : vector<32x8xf32>, vector<8x8xf32>, vector<32x8xf32> -> vector<32x8xf32>
    %56 = arith.addf %52, %55 : vector<32x8xf32>
    %c0_41 = arith.constant 0 : index
    %c0_42 = arith.constant 0 : index
    %c0_43 = arith.constant 0 : index
    %57 = vector.load %arg9[%c0_41, %c0_42, %c0_43] : memref<4x1x8xf32, #tpu.memory_space<vmem>>, vector<1x1x8xf32>
    %58 = vector.shape_cast %57 : vector<1x1x8xf32> to vector<1x8xf32>
    %59 = vector.broadcast %58 : vector<1x8xf32> to vector<32x8xf32>
    %60 = arith.addf %56, %59 : vector<32x8xf32>
    %cst_44 = arith.constant 0.000000e+00 : f32
    %61 = vector.broadcast %cst_44 : f32 to vector<32x8xf32>
    %62 = arith.maximumf %60, %61 : vector<32x8xf32>
    %63 = arith.addf %8, %62 : vector<32x8xf32>
    %c8_45 = arith.constant 8 : index
    %c0_46 = arith.constant 0 : index
    %64 = vector.load %arg13[%c8_45, %c0_46] : memref<48x8xf32, #tpu.memory_space<vmem>>, vector<32x8xf32>
    tpu.vector_store %arg13[%c8_45, %c0_46], %63 {strides = array<i32>} : memref<48x8xf32, #tpu.memory_space<vmem>>, vector<32x8xf32>,
    %c1 = arith.constant 1 : index
    %c0_47 = arith.constant 0 : index
    %c0_48 = arith.constant 0 : index
    %c0_49 = arith.constant 0 : index
    %65 = vector.load %arg4[%c1, %c0_47, %c0_48, %c0_49] : memref<4x3x8x8xf32, #tpu.memory_space<vmem>>, vector<1x3x8x8xf32>
    %66 = vector.shape_cast %65 : vector<1x3x8x8xf32> to vector<3x8x8xf32>
    %c1_50 = arith.constant 1 : index
    %c0_51 = arith.constant 0 : index
    %c0_52 = arith.constant 0 : index
    %c0_53 = arith.constant 0 : index
    %67 = vector.load %arg6[%c1_50, %c0_51, %c0_52, %c0_53] : memref<4x3x8x8xf32, #tpu.memory_space<vmem>>, vector<1x3x8x8xf32>
    %68 = vector.shape_cast %67 : vector<1x3x8x8xf32> to vector<3x8x8xf32>
    %c1_54 = arith.constant 1 : index
    %c0_55 = arith.constant 0 : index
    %c0_56 = arith.constant 0 : index
    %c0_57 = arith.constant 0 : index
    %69 = vector.load %arg8[%c1_54, %c0_55, %c0_56, %c0_57] : memref<4x2x8x8xf32, #tpu.memory_space<vmem>>, vector<1x2x8x8xf32>
    %70 = vector.shape_cast %69 : vector<1x2x8x8xf32> to vector<2x8x8xf32>
    %c1_58 = arith.constant 1 : index
    %c0_59 = arith.constant 0 : index
    %c0_60 = arith.constant 0 : index
    %71 = vector.load %arg5[%c1_58, %c0_59, %c0_60] : memref<4x1x8xf32, #tpu.memory_space<vmem>>, vector<1x1x8xf32>
    %72 = vector.shape_cast %71 : vector<1x1x8xf32> to vector<1x8xf32>
    %c4 = arith.constant 4 : index
    %c0_61 = arith.constant 0 : index
    %73 = vector.load %arg13[%c4, %c0_61] : memref<48x8xf32, #tpu.memory_space<vmem>>, vector<32x8xf32>
    %c12 = arith.constant 12 : index
    %c0_62 = arith.constant 0 : index
    %74 = vector.load %arg13[%c12, %c0_62] : memref<48x8xf32, #tpu.memory_space<vmem>>, vector<32x8xf32>
    %75 = vector.extract_strided_slice %66 {offsets = [0, 0, 0], sizes = [1, 8, 8], strides = [1, 1, 1]} : vector<3x8x8xf32> to vector<1x8x8xf32>
    %76 = vector.shape_cast %75 : vector<1x8x8xf32> to vector<8x8xf32>
    %cst_63 = arith.constant dense<0.000000e+00> : vector<32x8xf32>
    %77 = tpu.matmul %73, %76, %cst_63 {dimension_numbers = #tpu.dot_dimension_numbers<[1], [0], [0], [1], [0, 0, 1, 1], [], []>} : vector<32x8xf32>, vector<8x8xf32>, vector<32x8xf32> -> vector<32x8xf32>
    %78 = vector.extract_strided_slice %66 {offsets = [1, 0, 0], sizes = [1, 8, 8], strides = [1, 1, 1]} : vector<3x8x8xf32> to vector<1x8x8xf32>
    %79 = vector.shape_cast %78 : vector<1x8x8xf32> to vector<8x8xf32>
    %cst_64 = arith.constant dense<0.000000e+00> : vector<32x8xf32>
    %80 = tpu.matmul %63, %79, %cst_64 {dimension_numbers = #tpu.dot_dimension_numbers<[1], [0], [0], [1], [0, 0, 1, 1], [], []>} : vector<32x8xf32>, vector<8x8xf32>, vector<32x8xf32> -> vector<32x8xf32>
    %81 = arith.addf %77, %80 : vector<32x8xf32>
    %82 = vector.extract_strided_slice %66 {offsets = [2, 0, 0], sizes = [1, 8, 8], strides = [1, 1, 1]} : vector<3x8x8xf32> to vector<1x8x8xf32>
    %83 = vector.shape_cast %82 : vector<1x8x8xf32> to vector<8x8xf32>
    %cst_65 = arith.constant dense<0.000000e+00> : vector<32x8xf32>
    %84 = tpu.matmul %74, %83, %cst_65 {dimension_numbers = #tpu.dot_dimension_numbers<[1], [0], [0], [1], [0, 0, 1, 1], [], []>} : vector<32x8xf32>, vector<8x8xf32>, vector<32x8xf32> -> vector<32x8xf32>
    %85 = arith.addf %81, %84 : vector<32x8xf32>
    %86 = vector.broadcast %72 : vector<1x8xf32> to vector<32x8xf32>
    %87 = arith.addf %85, %86 : vector<32x8xf32>
    %c1_66 = arith.constant 1 : index
    %c0_67 = arith.constant 0 : index
    %c0_68 = arith.constant 0 : index
    %88 = vector.load %arg7[%c1_66, %c0_67, %c0_68] : memref<4x1x8xf32, #tpu.memory_space<vmem>>, vector<1x1x8xf32>
    %89 = vector.shape_cast %88 : vector<1x1x8xf32> to vector<1x8xf32>
    %c6 = arith.constant 6 : index
    %c0_69 = arith.constant 0 : index
    %90 = vector.load %arg13[%c6, %c0_69] : memref<48x8xf32, #tpu.memory_space<vmem>>, vector<32x8xf32>
    %c10 = arith.constant 10 : index
    %c0_70 = arith.constant 0 : index
    %91 = vector.load %arg13[%c10, %c0_70] : memref<48x8xf32, #tpu.memory_space<vmem>>, vector<32x8xf32>
    %92 = vector.extract_strided_slice %68 {offsets = [0, 0, 0], sizes = [1, 8, 8], strides = [1, 1, 1]} : vector<3x8x8xf32> to vector<1x8x8xf32>
    %93 = vector.shape_cast %92 : vector<1x8x8xf32> to vector<8x8xf32>
    %cst_71 = arith.constant dense<0.000000e+00> : vector<32x8xf32>
    %94 = tpu.matmul %90, %93, %cst_71 {dimension_numbers = #tpu.dot_dimension_numbers<[1], [0], [0], [1], [0, 0, 1, 1], [], []>} : vector<32x8xf32>, vector<8x8xf32>, vector<32x8xf32> -> vector<32x8xf32>
    %95 = vector.extract_strided_slice %68 {offsets = [1, 0, 0], sizes = [1, 8, 8], strides = [1, 1, 1]} : vector<3x8x8xf32> to vector<1x8x8xf32>
    %96 = vector.shape_cast %95 : vector<1x8x8xf32> to vector<8x8xf32>
    %cst_72 = arith.constant dense<0.000000e+00> : vector<32x8xf32>
    %97 = tpu.matmul %63, %96, %cst_72 {dimension_numbers = #tpu.dot_dimension_numbers<[1], [0], [0], [1], [0, 0, 1, 1], [], []>} : vector<32x8xf32>, vector<8x8xf32>, vector<32x8xf32> -> vector<32x8xf32>
    %98 = arith.addf %94, %97 : vector<32x8xf32>
    %99 = vector.extract_strided_slice %68 {offsets = [2, 0, 0], sizes = [1, 8, 8], strides = [1, 1, 1]} : vector<3x8x8xf32> to vector<1x8x8xf32>
    %100 = vector.shape_cast %99 : vector<1x8x8xf32> to vector<8x8xf32>
    %cst_73 = arith.constant dense<0.000000e+00> : vector<32x8xf32>
    %101 = tpu.matmul %91, %100, %cst_73 {dimension_numbers = #tpu.dot_dimension_numbers<[1], [0], [0], [1], [0, 0, 1, 1], [], []>} : vector<32x8xf32>, vector<8x8xf32>, vector<32x8xf32> -> vector<32x8xf32>
    %102 = arith.addf %98, %101 : vector<32x8xf32>
    %103 = vector.broadcast %89 : vector<1x8xf32> to vector<32x8xf32>
    %104 = arith.addf %102, %103 : vector<32x8xf32>
    %105 = vector.extract_strided_slice %70 {offsets = [0, 0, 0], sizes = [1, 8, 8], strides = [1, 1, 1]} : vector<2x8x8xf32> to vector<1x8x8xf32>
    %106 = vector.shape_cast %105 : vector<1x8x8xf32> to vector<8x8xf32>
    %cst_74 = arith.constant dense<0.000000e+00> : vector<32x8xf32>
    %107 = tpu.matmul %87, %106, %cst_74 {dimension_numbers = #tpu.dot_dimension_numbers<[1], [0], [0], [1], [0, 0, 1, 1], [], []>} : vector<32x8xf32>, vector<8x8xf32>, vector<32x8xf32> -> vector<32x8xf32>
    %108 = vector.extract_strided_slice %70 {offsets = [1, 0, 0], sizes = [1, 8, 8], strides = [1, 1, 1]} : vector<2x8x8xf32> to vector<1x8x8xf32>
    %109 = vector.shape_cast %108 : vector<1x8x8xf32> to vector<8x8xf32>
    %cst_75 = arith.constant dense<0.000000e+00> : vector<32x8xf32>
    %110 = tpu.matmul %104, %109, %cst_75 {dimension_numbers = #tpu.dot_dimension_numbers<[1], [0], [0], [1], [0, 0, 1, 1], [], []>} : vector<32x8xf32>, vector<8x8xf32>, vector<32x8xf32> -> vector<32x8xf32>
    %111 = arith.addf %107, %110 : vector<32x8xf32>
    %c1_76 = arith.constant 1 : index
    %c0_77 = arith.constant 0 : index
    %c0_78 = arith.constant 0 : index
    %112 = vector.load %arg9[%c1_76, %c0_77, %c0_78] : memref<4x1x8xf32, #tpu.memory_space<vmem>>, vector<1x1x8xf32>
    %113 = vector.shape_cast %112 : vector<1x1x8xf32> to vector<1x8xf32>
    %114 = vector.broadcast %113 : vector<1x8xf32> to vector<32x8xf32>
    %115 = arith.addf %111, %114 : vector<32x8xf32>
    %cst_79 = arith.constant 0.000000e+00 : f32
    %116 = vector.broadcast %cst_79 : f32 to vector<32x8xf32>
    %117 = arith.maximumf %115, %116 : vector<32x8xf32>
    %118 = arith.addf %63, %117 : vector<32x8xf32>
    %c8_80 = arith.constant 8 : index
    %c0_81 = arith.constant 0 : index
    %119 = vector.load %arg13[%c8_80, %c0_81] : memref<48x8xf32, #tpu.memory_space<vmem>>, vector<32x8xf32>
    tpu.vector_store %arg13[%c8_80, %c0_81], %118 {strides = array<i32>} : memref<48x8xf32, #tpu.memory_space<vmem>>, vector<32x8xf32>,
    %c2 = arith.constant 2 : index
    %c0_82 = arith.constant 0 : index
    %c0_83 = arith.constant 0 : index
    %c0_84 = arith.constant 0 : index
    %120 = vector.load %arg4[%c2, %c0_82, %c0_83, %c0_84] : memref<4x3x8x8xf32, #tpu.memory_space<vmem>>, vector<1x3x8x8xf32>
    %121 = vector.shape_cast %120 : vector<1x3x8x8xf32> to vector<3x8x8xf32>
    %c2_85 = arith.constant 2 : index
    %c0_86 = arith.constant 0 : index
    %c0_87 = arith.constant 0 : index
    %c0_88 = arith.constant 0 : index
    %122 = vector.load %arg6[%c2_85, %c0_86, %c0_87, %c0_88] : memref<4x3x8x8xf32, #tpu.memory_space<vmem>>, vector<1x3x8x8xf32>
    %123 = vector.shape_cast %122 : vector<1x3x8x8xf32> to vector<3x8x8xf32>
    %c2_89 = arith.constant 2 : index
    %c0_90 = arith.constant 0 : index
    %c0_91 = arith.constant 0 : index
    %c0_92 = arith.constant 0 : index
    %124 = vector.load %arg8[%c2_89, %c0_90, %c0_91, %c0_92] : memref<4x2x8x8xf32, #tpu.memory_space<vmem>>, vector<1x2x8x8xf32>
    %125 = vector.shape_cast %124 : vector<1x2x8x8xf32> to vector<2x8x8xf32>
    %c2_93 = arith.constant 2 : index
    %c0_94 = arith.constant 0 : index
    %c0_95 = arith.constant 0 : index
    %126 = vector.load %arg5[%c2_93, %c0_94, %c0_95] : memref<4x1x8xf32, #tpu.memory_space<vmem>>, vector<1x1x8xf32>
    %127 = vector.shape_cast %126 : vector<1x1x8xf32> to vector<1x8xf32>
    %c6_96 = arith.constant 6 : index
    %c0_97 = arith.constant 0 : index
    %128 = vector.load %arg13[%c6_96, %c0_97] : memref<48x8xf32, #tpu.memory_space<vmem>>, vector<32x8xf32>
    %c10_98 = arith.constant 10 : index
    %c0_99 = arith.constant 0 : index
    %129 = vector.load %arg13[%c10_98, %c0_99] : memref<48x8xf32, #tpu.memory_space<vmem>>, vector<32x8xf32>
    %130 = vector.extract_strided_slice %121 {offsets = [0, 0, 0], sizes = [1, 8, 8], strides = [1, 1, 1]} : vector<3x8x8xf32> to vector<1x8x8xf32>
    %131 = vector.shape_cast %130 : vector<1x8x8xf32> to vector<8x8xf32>
    %cst_100 = arith.constant dense<0.000000e+00> : vector<32x8xf32>
    %132 = tpu.matmul %128, %131, %cst_100 {dimension_numbers = #tpu.dot_dimension_numbers<[1], [0], [0], [1], [0, 0, 1, 1], [], []>} : vector<32x8xf32>, vector<8x8xf32>, vector<32x8xf32> -> vector<32x8xf32>
    %133 = vector.extract_strided_slice %121 {offsets = [1, 0, 0], sizes = [1, 8, 8], strides = [1, 1, 1]} : vector<3x8x8xf32> to vector<1x8x8xf32>
    %134 = vector.shape_cast %133 : vector<1x8x8xf32> to vector<8x8xf32>
    %cst_101 = arith.constant dense<0.000000e+00> : vector<32x8xf32>
    %135 = tpu.matmul %118, %134, %cst_101 {dimension_numbers = #tpu.dot_dimension_numbers<[1], [0], [0], [1], [0, 0, 1, 1], [], []>} : vector<32x8xf32>, vector<8x8xf32>, vector<32x8xf32> -> vector<32x8xf32>
    %136 = arith.addf %132, %135 : vector<32x8xf32>
    %137 = vector.extract_strided_slice %121 {offsets = [2, 0, 0], sizes = [1, 8, 8], strides = [1, 1, 1]} : vector<3x8x8xf32> to vector<1x8x8xf32>
    %138 = vector.shape_cast %137 : vector<1x8x8xf32> to vector<8x8xf32>
    %cst_102 = arith.constant dense<0.000000e+00> : vector<32x8xf32>
    %139 = tpu.matmul %129, %138, %cst_102 {dimension_numbers = #tpu.dot_dimension_numbers<[1], [0], [0], [1], [0, 0, 1, 1], [], []>} : vector<32x8xf32>, vector<8x8xf32>, vector<32x8xf32> -> vector<32x8xf32>
    %140 = arith.addf %136, %139 : vector<32x8xf32>
    %141 = vector.broadcast %127 : vector<1x8xf32> to vector<32x8xf32>
    %142 = arith.addf %140, %141 : vector<32x8xf32>
    %c2_103 = arith.constant 2 : index
    %c0_104 = arith.constant 0 : index
    %c0_105 = arith.constant 0 : index
    %143 = vector.load %arg7[%c2_103, %c0_104, %c0_105] : memref<4x1x8xf32, #tpu.memory_space<vmem>>, vector<1x1x8xf32>
    %144 = vector.shape_cast %143 : vector<1x1x8xf32> to vector<1x8xf32>
    %c4_106 = arith.constant 4 : index
    %c0_107 = arith.constant 0 : index
    %145 = vector.load %arg13[%c4_106, %c0_107] : memref<48x8xf32, #tpu.memory_space<vmem>>, vector<32x8xf32>
    %c12_108 = arith.constant 12 : index
    %c0_109 = arith.constant 0 : index
    %146 = vector.load %arg13[%c12_108, %c0_109] : memref<48x8xf32, #tpu.memory_space<vmem>>, vector<32x8xf32>
    %147 = vector.extract_strided_slice %123 {offsets = [0, 0, 0], sizes = [1, 8, 8], strides = [1, 1, 1]} : vector<3x8x8xf32> to vector<1x8x8xf32>
    %148 = vector.shape_cast %147 : vector<1x8x8xf32> to vector<8x8xf32>
    %cst_110 = arith.constant dense<0.000000e+00> : vector<32x8xf32>
    %149 = tpu.matmul %145, %148, %cst_110 {dimension_numbers = #tpu.dot_dimension_numbers<[1], [0], [0], [1], [0, 0, 1, 1], [], []>} : vector<32x8xf32>, vector<8x8xf32>, vector<32x8xf32> -> vector<32x8xf32>
    %150 = vector.extract_strided_slice %123 {offsets = [1, 0, 0], sizes = [1, 8, 8], strides = [1, 1, 1]} : vector<3x8x8xf32> to vector<1x8x8xf32>
    %151 = vector.shape_cast %150 : vector<1x8x8xf32> to vector<8x8xf32>
    %cst_111 = arith.constant dense<0.000000e+00> : vector<32x8xf32>
    %152 = tpu.matmul %118, %151, %cst_111 {dimension_numbers = #tpu.dot_dimension_numbers<[1], [0], [0], [1], [0, 0, 1, 1], [], []>} : vector<32x8xf32>, vector<8x8xf32>, vector<32x8xf32> -> vector<32x8xf32>
    %153 = arith.addf %149, %152 : vector<32x8xf32>
    %154 = vector.extract_strided_slice %123 {offsets = [2, 0, 0], sizes = [1, 8, 8], strides = [1, 1, 1]} : vector<3x8x8xf32> to vector<1x8x8xf32>
    %155 = vector.shape_cast %154 : vector<1x8x8xf32> to vector<8x8xf32>
    %cst_112 = arith.constant dense<0.000000e+00> : vector<32x8xf32>
    %156 = tpu.matmul %146, %155, %cst_112 {dimension_numbers = #tpu.dot_dimension_numbers<[1], [0], [0], [1], [0, 0, 1, 1], [], []>} : vector<32x8xf32>, vector<8x8xf32>, vector<32x8xf32> -> vector<32x8xf32>
    %157 = arith.addf %153, %156 : vector<32x8xf32>
    %158 = vector.broadcast %144 : vector<1x8xf32> to vector<32x8xf32>
    %159 = arith.addf %157, %158 : vector<32x8xf32>
    %160 = vector.extract_strided_slice %125 {offsets = [0, 0, 0], sizes = [1, 8, 8], strides = [1, 1, 1]} : vector<2x8x8xf32> to vector<1x8x8xf32>
    %161 = vector.shape_cast %160 : vector<1x8x8xf32> to vector<8x8xf32>
    %cst_113 = arith.constant dense<0.000000e+00> : vector<32x8xf32>
    %162 = tpu.matmul %142, %161, %cst_113 {dimension_numbers = #tpu.dot_dimension_numbers<[1], [0], [0], [1], [0, 0, 1, 1], [], []>} : vector<32x8xf32>, vector<8x8xf32>, vector<32x8xf32> -> vector<32x8xf32>
    %163 = vector.extract_strided_slice %125 {offsets = [1, 0, 0], sizes = [1, 8, 8], strides = [1, 1, 1]} : vector<2x8x8xf32> to vector<1x8x8xf32>
    %164 = vector.shape_cast %163 : vector<1x8x8xf32> to vector<8x8xf32>
    %cst_114 = arith.constant dense<0.000000e+00> : vector<32x8xf32>
    %165 = tpu.matmul %159, %164, %cst_114 {dimension_numbers = #tpu.dot_dimension_numbers<[1], [0], [0], [1], [0, 0, 1, 1], [], []>} : vector<32x8xf32>, vector<8x8xf32>, vector<32x8xf32> -> vector<32x8xf32>
    %166 = arith.addf %162, %165 : vector<32x8xf32>
    %c2_115 = arith.constant 2 : index
    %c0_116 = arith.constant 0 : index
    %c0_117 = arith.constant 0 : index
    %167 = vector.load %arg9[%c2_115, %c0_116, %c0_117] : memref<4x1x8xf32, #tpu.memory_space<vmem>>, vector<1x1x8xf32>
    %168 = vector.shape_cast %167 : vector<1x1x8xf32> to vector<1x8xf32>
    %169 = vector.broadcast %168 : vector<1x8xf32> to vector<32x8xf32>
    %170 = arith.addf %166, %169 : vector<32x8xf32>
    %cst_118 = arith.constant 0.000000e+00 : f32
    %171 = vector.broadcast %cst_118 : f32 to vector<32x8xf32>
    %172 = arith.maximumf %170, %171 : vector<32x8xf32>
    %173 = arith.addf %118, %172 : vector<32x8xf32>
    %c8_119 = arith.constant 8 : index
    %c0_120 = arith.constant 0 : index
    %174 = vector.load %arg13[%c8_119, %c0_120] : memref<48x8xf32, #tpu.memory_space<vmem>>, vector<32x8xf32>
    tpu.vector_store %arg13[%c8_119, %c0_120], %173 {strides = array<i32>} : memref<48x8xf32, #tpu.memory_space<vmem>>, vector<32x8xf32>,
    %c3 = arith.constant 3 : index
    %c0_121 = arith.constant 0 : index
    %c0_122 = arith.constant 0 : index
    %c0_123 = arith.constant 0 : index
    %175 = vector.load %arg4[%c3, %c0_121, %c0_122, %c0_123] : memref<4x3x8x8xf32, #tpu.memory_space<vmem>>, vector<1x3x8x8xf32>
    %176 = vector.shape_cast %175 : vector<1x3x8x8xf32> to vector<3x8x8xf32>
    %c3_124 = arith.constant 3 : index
    %c0_125 = arith.constant 0 : index
    %c0_126 = arith.constant 0 : index
    %c0_127 = arith.constant 0 : index
    %177 = vector.load %arg6[%c3_124, %c0_125, %c0_126, %c0_127] : memref<4x3x8x8xf32, #tpu.memory_space<vmem>>, vector<1x3x8x8xf32>
    %178 = vector.shape_cast %177 : vector<1x3x8x8xf32> to vector<3x8x8xf32>
    %c3_128 = arith.constant 3 : index
    %c0_129 = arith.constant 0 : index
    %c0_130 = arith.constant 0 : index
    %c0_131 = arith.constant 0 : index
    %179 = vector.load %arg8[%c3_128, %c0_129, %c0_130, %c0_131] : memref<4x2x8x8xf32, #tpu.memory_space<vmem>>, vector<1x2x8x8xf32>
    %180 = vector.shape_cast %179 : vector<1x2x8x8xf32> to vector<2x8x8xf32>
    %c3_132 = arith.constant 3 : index
    %c0_133 = arith.constant 0 : index
    %c0_134 = arith.constant 0 : index
    %181 = vector.load %arg5[%c3_132, %c0_133, %c0_134] : memref<4x1x8xf32, #tpu.memory_space<vmem>>, vector<1x1x8xf32>
    %182 = vector.shape_cast %181 : vector<1x1x8xf32> to vector<1x8xf32>
    %c7_135 = arith.constant 7 : index
    %c0_136 = arith.constant 0 : index
    %183 = vector.load %arg13[%c7_135, %c0_136] : memref<48x8xf32, #tpu.memory_space<vmem>>, vector<32x8xf32>
    %c9_137 = arith.constant 9 : index
    %c0_138 = arith.constant 0 : index
    %184 = vector.load %arg13[%c9_137, %c0_138] : memref<48x8xf32, #tpu.memory_space<vmem>>, vector<32x8xf32>
    %185 = vector.extract_strided_slice %176 {offsets = [0, 0, 0], sizes = [1, 8, 8], strides = [1, 1, 1]} : vector<3x8x8xf32> to vector<1x8x8xf32>
    %186 = vector.shape_cast %185 : vector<1x8x8xf32> to vector<8x8xf32>
    %cst_139 = arith.constant dense<0.000000e+00> : vector<32x8xf32>
    %187 = tpu.matmul %183, %186, %cst_139 {dimension_numbers = #tpu.dot_dimension_numbers<[1], [0], [0], [1], [0, 0, 1, 1], [], []>} : vector<32x8xf32>, vector<8x8xf32>, vector<32x8xf32> -> vector<32x8xf32>
    %188 = vector.extract_strided_slice %176 {offsets = [1, 0, 0], sizes = [1, 8, 8], strides = [1, 1, 1]} : vector<3x8x8xf32> to vector<1x8x8xf32>
    %189 = vector.shape_cast %188 : vector<1x8x8xf32> to vector<8x8xf32>
    %cst_140 = arith.constant dense<0.000000e+00> : vector<32x8xf32>
    %190 = tpu.matmul %173, %189, %cst_140 {dimension_numbers = #tpu.dot_dimension_numbers<[1], [0], [0], [1], [0, 0, 1, 1], [], []>} : vector<32x8xf32>, vector<8x8xf32>, vector<32x8xf32> -> vector<32x8xf32>
    %191 = arith.addf %187, %190 : vector<32x8xf32>
    %192 = vector.extract_strided_slice %176 {offsets = [2, 0, 0], sizes = [1, 8, 8], strides = [1, 1, 1]} : vector<3x8x8xf32> to vector<1x8x8xf32>
    %193 = vector.shape_cast %192 : vector<1x8x8xf32> to vector<8x8xf32>
    %cst_141 = arith.constant dense<0.000000e+00> : vector<32x8xf32>
    %194 = tpu.matmul %184, %193, %cst_141 {dimension_numbers = #tpu.dot_dimension_numbers<[1], [0], [0], [1], [0, 0, 1, 1], [], []>} : vector<32x8xf32>, vector<8x8xf32>, vector<32x8xf32> -> vector<32x8xf32>
    %195 = arith.addf %191, %194 : vector<32x8xf32>
    %196 = vector.broadcast %182 : vector<1x8xf32> to vector<32x8xf32>
    %197 = arith.addf %195, %196 : vector<32x8xf32>
    %c3_142 = arith.constant 3 : index
    %c0_143 = arith.constant 0 : index
    %c0_144 = arith.constant 0 : index
    %198 = vector.load %arg7[%c3_142, %c0_143, %c0_144] : memref<4x1x8xf32, #tpu.memory_space<vmem>>, vector<1x1x8xf32>
    %199 = vector.shape_cast %198 : vector<1x1x8xf32> to vector<1x8xf32>
    %c0_145 = arith.constant 0 : index
    %c0_146 = arith.constant 0 : index
    %200 = vector.load %arg13[%c0_145, %c0_146] : memref<48x8xf32, #tpu.memory_space<vmem>>, vector<32x8xf32>
    %c16_147 = arith.constant 16 : index
    %c0_148 = arith.constant 0 : index
    %201 = vector.load %arg13[%c16_147, %c0_148] : memref<48x8xf32, #tpu.memory_space<vmem>>, vector<32x8xf32>
    %202 = vector.extract_strided_slice %178 {offsets = [0, 0, 0], sizes = [1, 8, 8], strides = [1, 1, 1]} : vector<3x8x8xf32> to vector<1x8x8xf32>
    %203 = vector.shape_cast %202 : vector<1x8x8xf32> to vector<8x8xf32>
    %cst_149 = arith.constant dense<0.000000e+00> : vector<32x8xf32>
    %204 = tpu.matmul %200, %203, %cst_149 {dimension_numbers = #tpu.dot_dimension_numbers<[1], [0], [0], [1], [0, 0, 1, 1], [], []>} : vector<32x8xf32>, vector<8x8xf32>, vector<32x8xf32> -> vector<32x8xf32>
    %205 = vector.extract_strided_slice %178 {offsets = [1, 0, 0], sizes = [1, 8, 8], strides = [1, 1, 1]} : vector<3x8x8xf32> to vector<1x8x8xf32>
    %206 = vector.shape_cast %205 : vector<1x8x8xf32> to vector<8x8xf32>
    %cst_150 = arith.constant dense<0.000000e+00> : vector<32x8xf32>
    %207 = tpu.matmul %173, %206, %cst_150 {dimension_numbers = #tpu.dot_dimension_numbers<[1], [0], [0], [1], [0, 0, 1, 1], [], []>} : vector<32x8xf32>, vector<8x8xf32>, vector<32x8xf32> -> vector<32x8xf32>
    %208 = arith.addf %204, %207 : vector<32x8xf32>
    %209 = vector.extract_strided_slice %178 {offsets = [2, 0, 0], sizes = [1, 8, 8], strides = [1, 1, 1]} : vector<3x8x8xf32> to vector<1x8x8xf32>
    %210 = vector.shape_cast %209 : vector<1x8x8xf32> to vector<8x8xf32>
    %cst_151 = arith.constant dense<0.000000e+00> : vector<32x8xf32>
    %211 = tpu.matmul %201, %210, %cst_151 {dimension_numbers = #tpu.dot_dimension_numbers<[1], [0], [0], [1], [0, 0, 1, 1], [], []>} : vector<32x8xf32>, vector<8x8xf32>, vector<32x8xf32> -> vector<32x8xf32>
    %212 = arith.addf %208, %211 : vector<32x8xf32>
    %213 = vector.broadcast %199 : vector<1x8xf32> to vector<32x8xf32>
    %214 = arith.addf %212, %213 : vector<32x8xf32>
    %215 = vector.extract_strided_slice %180 {offsets = [0, 0, 0], sizes = [1, 8, 8], strides = [1, 1, 1]} : vector<2x8x8xf32> to vector<1x8x8xf32>
    %216 = vector.shape_cast %215 : vector<1x8x8xf32> to vector<8x8xf32>
    %cst_152 = arith.constant dense<0.000000e+00> : vector<32x8xf32>
    %217 = tpu.matmul %197, %216, %cst_152 {dimension_numbers = #tpu.dot_dimension_numbers<[1], [0], [0], [1], [0, 0, 1, 1], [], []>} : vector<32x8xf32>, vector<8x8xf32>, vector<32x8xf32> -> vector<32x8xf32>
    %218 = vector.extract_strided_slice %180 {offsets = [1, 0, 0], sizes = [1, 8, 8], strides = [1, 1, 1]} : vector<2x8x8xf32> to vector<1x8x8xf32>
    %219 = vector.shape_cast %218 : vector<1x8x8xf32> to vector<8x8xf32>
    %cst_153 = arith.constant dense<0.000000e+00> : vector<32x8xf32>
    %220 = tpu.matmul %214, %219, %cst_153 {dimension_numbers = #tpu.dot_dimension_numbers<[1], [0], [0], [1], [0, 0, 1, 1], [], []>} : vector<32x8xf32>, vector<8x8xf32>, vector<32x8xf32> -> vector<32x8xf32>
    %221 = arith.addf %217, %220 : vector<32x8xf32>
    %c3_154 = arith.constant 3 : index
    %c0_155 = arith.constant 0 : index
    %c0_156 = arith.constant 0 : index
    %222 = vector.load %arg9[%c3_154, %c0_155, %c0_156] : memref<4x1x8xf32, #tpu.memory_space<vmem>>, vector<1x1x8xf32>
    %223 = vector.shape_cast %222 : vector<1x1x8xf32> to vector<1x8xf32>
    %224 = vector.broadcast %223 : vector<1x8xf32> to vector<32x8xf32>
    %225 = arith.addf %221, %224 : vector<32x8xf32>
    %cst_157 = arith.constant 0.000000e+00 : f32
    %226 = vector.broadcast %cst_157 : f32 to vector<32x8xf32>
    %227 = arith.maximumf %225, %226 : vector<32x8xf32>
    %228 = arith.addf %173, %227 : vector<32x8xf32>
    %c0_158 = arith.constant 0 : index
    %c0_159 = arith.constant 0 : index
    %229 = vector.load %arg10[%c0_158, %c0_159] : memref<8x8xf32, #tpu.memory_space<vmem>>, vector<8x8xf32>
    %cst_160 = arith.constant dense<0.000000e+00> : vector<32x8xf32>
    %230 = tpu.matmul %228, %229, %cst_160 {dimension_numbers = #tpu.dot_dimension_numbers<[1], [0], [0], [1], [0, 0, 1, 1], [], []>} : vector<32x8xf32>, vector<8x8xf32>, vector<32x8xf32> -> vector<32x8xf32>
    %c0_161 = arith.constant 0 : index
    %c0_162 = arith.constant 0 : index
    %231 = vector.load %arg11[%c0_161, %c0_162] : memref<1x8xf32, #tpu.memory_space<vmem>>, vector<1x8xf32>
    %232 = vector.broadcast %231 : vector<1x8xf32> to vector<32x8xf32>
    %233 = arith.addf %230, %232 : vector<32x8xf32>
    %c0_163 = arith.constant 0 : index
    %c0_164 = arith.constant 0 : index
    %c0_165 = arith.constant 0 : index
    %234 = vector.load %arg12[%c0_163, %c0_164, %c0_165] : memref<1x32x8xf32, #tpu.memory_space<vmem>>, vector<1x32x8xf32>
    %235 = vector.shape_cast %234 : vector<1x32x8xf32> to vector<32x8xf32>
    %236 = vector.shape_cast %233 : vector<32x8xf32> to vector<1x32x8xf32>
    tpu.vector_store %arg12[%c0_163, %c0_164, %c0_165], %236 {strides = array<i32>} : memref<1x32x8xf32, #tpu.memory_space<vmem>>, vector<1x32x8xf32>,
    return
  }
  func.func @transform_0(%arg0: i32) -> (i32, i32, i32) {
    %c0_i32 = arith.constant 0 : i32
    %c0_i32_0 = arith.constant 0 : i32
    %c0_i32_1 = arith.constant 0 : i32
    return %arg0, %c0_i32, %c0_i32_0 : i32, i32, i32
  }
  func.func @transform_1(%arg0: i32) -> (i32, i32) {
    %c0_i32 = arith.constant 0 : i32
    %c0_i32_0 = arith.constant 0 : i32
    %c0_i32_1 = arith.constant 0 : i32
    return %c0_i32, %c0_i32_0 : i32, i32
  }
  func.func @transform_2(%arg0: i32) -> (i32, i32) {
    %c0_i32 = arith.constant 0 : i32
    %c0_i32_0 = arith.constant 0 : i32
    %c0_i32_1 = arith.constant 0 : i32
    return %c0_i32, %c0_i32_0 : i32, i32
  }
  func.func @transform_3(%arg0: i32) -> (i32, i32, i32, i32) {
    %c0_i32 = arith.constant 0 : i32
    %c0_i32_0 = arith.constant 0 : i32
    %c0_i32_1 = arith.constant 0 : i32
    %c0_i32_2 = arith.constant 0 : i32
    %c0_i32_3 = arith.constant 0 : i32
    return %c0_i32, %c0_i32_0, %c0_i32_1, %c0_i32_2 : i32, i32, i32, i32
  }
  func.func @transform_4(%arg0: i32) -> (i32, i32, i32) {
    %c0_i32 = arith.constant 0 : i32
    %c0_i32_0 = arith.constant 0 : i32
    %c0_i32_1 = arith.constant 0 : i32
    %c0_i32_2 = arith.constant 0 : i32
    return %c0_i32, %c0_i32_0, %c0_i32_1 : i32, i32, i32
  }
  func.func @transform_5(%arg0: i32) -> (i32, i32, i32, i32) {
    %c0_i32 = arith.constant 0 : i32
    %c0_i32_0 = arith.constant 0 : i32
    %c0_i32_1 = arith.constant 0 : i32
    %c0_i32_2 = arith.constant 0 : i32
    %c0_i32_3 = arith.constant 0 : i32
    return %c0_i32, %c0_i32_0, %c0_i32_1, %c0_i32_2 : i32, i32, i32, i32
  }
  func.func @transform_6(%arg0: i32) -> (i32, i32, i32) {
    %c0_i32 = arith.constant 0 : i32
    %c0_i32_0 = arith.constant 0 : i32
    %c0_i32_1 = arith.constant 0 : i32
    %c0_i32_2 = arith.constant 0 : i32
    return %c0_i32, %c0_i32_0, %c0_i32_1 : i32, i32, i32
  }
  func.func @transform_7(%arg0: i32) -> (i32, i32, i32, i32) {
    %c0_i32 = arith.constant 0 : i32
    %c0_i32_0 = arith.constant 0 : i32
    %c0_i32_1 = arith.constant 0 : i32
    %c0_i32_2 = arith.constant 0 : i32
    %c0_i32_3 = arith.constant 0 : i32
    return %c0_i32, %c0_i32_0, %c0_i32_1, %c0_i32_2 : i32, i32, i32, i32
  }
  func.func @transform_8(%arg0: i32) -> (i32, i32, i32) {
    %c0_i32 = arith.constant 0 : i32
    %c0_i32_0 = arith.constant 0 : i32
    %c0_i32_1 = arith.constant 0 : i32
    %c0_i32_2 = arith.constant 0 : i32
    return %c0_i32, %c0_i32_0, %c0_i32_1 : i32, i32, i32
  }
  func.func @transform_9(%arg0: i32) -> (i32, i32) {
    %c0_i32 = arith.constant 0 : i32
    %c0_i32_0 = arith.constant 0 : i32
    %c0_i32_1 = arith.constant 0 : i32
    return %c0_i32, %c0_i32_0 : i32, i32
  }
  func.func @transform_10(%arg0: i32) -> (i32, i32) {
    %c0_i32 = arith.constant 0 : i32
    %c0_i32_0 = arith.constant 0 : i32
    %c0_i32_1 = arith.constant 0 : i32
    return %c0_i32, %c0_i32_0 : i32, i32
  }
  func.func @transform_11(%arg0: i32) -> (i32, i32, i32) {
    %c0_i32 = arith.constant 0 : i32
    %c0_i32_0 = arith.constant 0 : i32
    %c0_i32_1 = arith.constant 0 : i32
    return %arg0, %c0_i32, %c0_i32_0 : i32, i32, i32
  }
}

</mosaic_0001>

<llo_original>
// kernel: tpu_custom_call.1
$region0: #{tpu_custom_call.1}
  #allocation0 [shape = 'u32[]', space=smem, size = 0x4, offset = 0x4, fixed_abs, tag = 'smem constant byte address 0x4 - core index']
  #allocation1 [shape = 'u32[72,128]{1,0:T(1,128)}', space=vmem, size = 0x9000, scoped, tag = 'internal scratch']
  #allocation2 [shape = 'f32[48,8]{1,0:T(8,128)}', space=vmem, size = 0x6000, scoped, tag = 'scratch operand']
  %s0 = inlined_call_operand.vmem [shape: f32[2,32,16], index: 0, kind: input, shape index: {}]
  %s1 = inlined_call_operand.vmem [shape: f32[16,8], index: 1, kind: input, shape index: {}]
  %s2 = inlined_call_operand.vmem [shape: f32[1,8], index: 2, kind: input, shape index: {}]
  %s3 = inlined_call_operand.vmem [shape: f32[4,3,8,8], index: 3, kind: input, shape index: {}]
  %s4 = inlined_call_operand.vmem [shape: f32[4,1,8], index: 4, kind: input, shape index: {}]
  %s5 = inlined_call_operand.hbm [shape: f32[4,3,8,8], index: 5, kind: input, shape index: {}]
  %s6 = inlined_call_operand.vmem [shape: f32[4,1,8], index: 6, kind: input, shape index: {}]
  %s7 = inlined_call_operand.hbm [shape: f32[4,2,8,8], index: 7, kind: input, shape index: {}]
  %s8 = inlined_call_operand.vmem [shape: f32[4,1,8], index: 8, kind: input, shape index: {}]
  %s9 = inlined_call_operand.vmem [shape: f32[8,8], index: 9, kind: input, shape index: {}]
  %s10 = inlined_call_operand.vmem [shape: f32[1,8], index: 10, kind: input, shape index: {}]
  %s11 = inlined_call_operand.vmem [shape: f32[2,32,8], index: 11, kind: output, shape index: {}]
  %s12 = sld [smem:[#allocation0]]
  $region85: #{tpu_custom_call.1} parent=0
    _
  %s14 = ssub.s32 1, %s12
  %s15 = scalar_select 0, %s14, %s12
  $region1: #{tpu_custom_call.1} parent=0
    #allocation3 [shape = 'u8[49152]{0}', space=vmem, size = 0xc000, scoped, tag = 'input window, operand 5, single buffered']
    #allocation4 [shape = 's32[2]{0}', space=sflag, size = 0x8, scoped, tag = 'scoped memory for tpu_custom_call.1']
    #allocation5 [shape = 'u8[32768]{0}', space=vmem, size = 0x8000, scoped, tag = 'input window, operand 7, single buffered']
    #allocation6 [shape = 's32[1]{0}', space=sflag, size = 0x4, scoped, tag = 'scoped memory for tpu_custom_call.1']
    %16 = vsyncpa [#allocation4], 0
    %17 = vsyncpa [#allocation6], 0
    loop: start=0, step=1, limit=4
    $region2: #{tpu_custom_call.1} parent=1 // loop_pre_header
      _
    $region3: #{tpu_custom_call.1} parent=1 // loop_header
      %s19 = sphi 0, %s23
      %p20 = scmp.ge.s32.totalorder %s19, 4
      %s29 = sphi 0, %s31
      %s32 = sphi 0, %s29
      %s33 = sphi 0, %s32
      %s49 = sphi 0, %s33
      %s53 = sphi 0, %s53
      %s55 = sphi 0, %s53
      %s56 = sphi 0, %s55
      %s70 = sphi 0, %s56
      %s74 = sphi 0, %s74
      %s76 = sphi 0, %s74
      %s77 = sphi 0, %s76
      %s91 = sphi 0, %s77
      %s95 = sphi 0, %s95
      %s97 = sphi 0, %s95
      %s98 = sphi 0, %s97
      %s112 = sphi 0, %s98
      %s116 = sphi 0, %s116
      %s118 = sphi 0, %s116
      %s119 = sphi 0, %s118
      %s133 = sphi 0, %s119
      %s137 = sphi 0, %s137
      %s139 = sphi 0, %s137
      %s140 = sphi 0, %s139
      %s154 = sphi 0, %s140
      %s158 = sphi 0, %s158
      %s160 = sphi 0, %s158
      %s161 = sphi 0, %s160
      %s175 = sphi 0, %s161
      %s179 = sphi 0, %s179
      %s181 = sphi 0, %s179
      %s182 = sphi 0, %s181
      %s196 = sphi 0, %s182
      %s200 = sphi 0, %s200
      %s202 = sphi 0, %s200
      %s203 = sphi 0, %s202
      %s217 = sphi 0, %s203
      %s221 = sphi 0, %s221
      %s223 = sphi 0, %s221
      %s224 = sphi 0, %s223
      %s238 = sphi 0, %s224
      %s242 = sphi 0, %s242
      %s244 = sphi 0, %s242
      %s245 = sphi 0, %s244
      %s259 = sphi 0, %s245
      %s265 = sphi 0, %s267
      %s268 = sphi 0, %s265
      %s269 = sphi 0, %s268
      %s285 = sphi 0, %s269
    $region4: #{tpu_custom_call.1} parent=1 // loop_header_branch
      %22 = sbr.rel (%p20) target = $region8
    $region5: #{tpu_custom_call.1} parent=1 // loop_body
      %s24 = ssub.s32 %s19, 1
      %s25 = ssub.s32 %s19, 2
      %s26 = sadd.s32 %s19, 1
      %s27 = ssub.s32 %s19, %s26
      %p28 = scmp.eq.s32.totalorder %s27, 0
      %s30 = sadd.s32 %s29, 1
      %s31 = scalar_select %p28, %s29, %s30
      %p34 = pneg %p28
      %p35 = scmp.eq.s32.totalorder %s19, 1
      %p36 = por %p34, %p35
      %p37 = scmp.ne.s32.totalorder %s29, %s32
      %p38 = scmp.eq.s32.totalorder %s19, 0
      %p39 = por %p37, %p38
      %p40 = scmp.ne.s32.totalorder %s29, %s32
      %p41 = scmp.eq.s32.totalorder %s24, 1
      %p42 = por %p40, %p41
      %p43 = scmp.ne.s32.totalorder %s32, %s33
      %p44 = scmp.eq.s32.totalorder %s24, 0
      %p45 = por %p43, %p44
      %p46 = scmp.ne.s32.totalorder %s32, %s33
      %p47 = scmp.eq.s32.totalorder %s25, 1
      %p48 = por %p46, %p47
      %p50 = scmp.ne.s32.totalorder %s33, %s49
      %p51 = scmp.eq.s32.totalorder %s25, 0
      %p52 = por %p50, %p51
      %s54 = sadd.s32 %s53, 1
      %p57 = scmp.eq.s32.totalorder %s19, 1
      %p58 = scmp.ne.s32.totalorder %s53, %s55
      %p59 = scmp.eq.s32.totalorder %s19, 0
      %p60 = por %p58, %p59
      %p61 = scmp.ne.s32.totalorder %s53, %s55
      %p62 = scmp.eq.s32.totalorder %s24, 1
      %p63 = por %p61, %p62
      %p64 = scmp.ne.s32.totalorder %s55, %s56
      %p65 = scmp.eq.s32.totalorder %s24, 0
      %p66 = por %p64, %p65
      %p67 = scmp.ne.s32.totalorder %s55, %s56
      %p68 = scmp.eq.s32.totalorder %s25, 1
      %p69 = por %p67, %p68
      %p71 = scmp.ne.s32.totalorder %s56, %s70
      %p72 = scmp.eq.s32.totalorder %s25, 0
      %p73 = por %p71, %p72
      %s75 = sadd.s32 %s74, 1
      %p78 = scmp.eq.s32.totalorder %s19, 1
      %p79 = scmp.ne.s32.totalorder %s74, %s76
      %p80 = scmp.eq.s32.totalorder %s19, 0
      %p81 = por %p79, %p80
      %p82 = scmp.ne.s32.totalorder %s74, %s76
      %p83 = scmp.eq.s32.totalorder %s24, 1
      %p84 = por %p82, %p83
      %p85 = scmp.ne.s32.totalorder %s76, %s77
      %p86 = scmp.eq.s32.totalorder %s24, 0
      %p87 = por %p85, %p86
      %p88 = scmp.ne.s32.totalorder %s76, %s77
      %p89 = scmp.eq.s32.totalorder %s25, 1
      %p90 = por %p88, %p89
      %p92 = scmp.ne.s32.totalorder %s77, %s91
      %p93 = scmp.eq.s32.totalorder %s25, 0
      %p94 = por %p92, %p93
      %s96 = sadd.s32 %s95, 1
      %p99 = scmp.eq.s32.totalorder %s19, 1
      %p100 = scmp.ne.s32.totalorder %s95, %s97
      %p101 = scmp.eq.s32.totalorder %s19, 0
      %p102 = por %p100, %p101
      %p103 = scmp.ne.s32.totalorder %s95, %s97
      %p104 = scmp.eq.s32.totalorder %s24, 1
      %p105 = por %p103, %p104
      %p106 = scmp.ne.s32.totalorder %s97, %s98
      %p107 = scmp.eq.s32.totalorder %s24, 0
      %p108 = por %p106, %p107
      %p109 = scmp.ne.s32.totalorder %s97, %s98
      %p110 = scmp.eq.s32.totalorder %s25, 1
      %p111 = por %p109, %p110
      %p113 = scmp.ne.s32.totalorder %s98, %s112
      %p114 = scmp.eq.s32.totalorder %s25, 0
      %p115 = por %p113, %p114
      %s117 = sadd.s32 %s116, 1
      %p120 = scmp.eq.s32.totalorder %s19, 1
      %p121 = scmp.ne.s32.totalorder %s116, %s118
      %p122 = scmp.eq.s32.totalorder %s19, 0
      %p123 = por %p121, %p122
      %p124 = scmp.ne.s32.totalorder %s116, %s118
      %p125 = scmp.eq.s32.totalorder %s24, 1
      %p126 = por %p124, %p125
      %p127 = scmp.ne.s32.totalorder %s118, %s119
      %p128 = scmp.eq.s32.totalorder %s24, 0
      %p129 = por %p127, %p128
      %p130 = scmp.ne.s32.totalorder %s118, %s119
      %p131 = scmp.eq.s32.totalorder %s25, 1
      %p132 = por %p130, %p131
      %p134 = scmp.ne.s32.totalorder %s119, %s133
      %p135 = scmp.eq.s32.totalorder %s25, 0
      %p136 = por %p134, %p135
      %s138 = sadd.s32 %s137, 1
      %p141 = scmp.eq.s32.totalorder %s19, 1
      %p142 = scmp.ne.s32.totalorder %s137, %s139
      %p143 = scmp.eq.s32.totalorder %s19, 0
      %p144 = por %p142, %p143
      %p145 = scmp.ne.s32.totalorder %s137, %s139
      %p146 = scmp.eq.s32.totalorder %s24, 1
      %p147 = por %p145, %p146
      %p148 = scmp.ne.s32.totalorder %s139, %s140
      %p149 = scmp.eq.s32.totalorder %s24, 0
      %p150 = por %p148, %p149
      %p151 = scmp.ne.s32.totalorder %s139, %s140
      %p152 = scmp.eq.s32.totalorder %s25, 1
      %p153 = por %p151, %p152
      %p155 = scmp.ne.s32.totalorder %s140, %s154
      %p156 = scmp.eq.s32.totalorder %s25, 0
      %p157 = por %p155, %p156
      %s159 = sadd.s32 %s158, 1
      %p162 = scmp.eq.s32.totalorder %s19, 1
      %p163 = scmp.ne.s32.totalorder %s158, %s160
      %p164 = scmp.eq.s32.totalorder %s19, 0
      %p165 = por %p163, %p164
      %p166 = scmp.ne.s32.totalorder %s158, %s160
      %p167 = scmp.eq.s32.totalorder %s24, 1
      %p168 = por %p166, %p167
      %p169 = scmp.ne.s32.totalorder %s160, %s161
      %p170 = scmp.eq.s32.totalorder %s24, 0
      %p171 = por %p169, %p170
      %p172 = scmp.ne.s32.totalorder %s160, %s161
      %p173 = scmp.eq.s32.totalorder %s25, 1
      %p174 = por %p172, %p173
      %p176 = scmp.ne.s32.totalorder %s161, %s175
      %p177 = scmp.eq.s32.totalorder %s25, 0
      %p178 = por %p176, %p177
      %s180 = sadd.s32 %s179, 1
      %p183 = scmp.eq.s32.totalorder %s19, 1
      %p184 = scmp.ne.s32.totalorder %s179, %s181
      %p185 = scmp.eq.s32.totalorder %s19, 0
      %p186 = por %p184, %p185
      %p187 = scmp.ne.s32.totalorder %s179, %s181
      %p188 = scmp.eq.s32.totalorder %s24, 1
      %p189 = por %p187, %p188
      %p190 = scmp.ne.s32.totalorder %s181, %s182
      %p191 = scmp.eq.s32.totalorder %s24, 0
      %p192 = por %p190, %p191
      %p193 = scmp.ne.s32.totalorder %s181, %s182
      %p194 = scmp.eq.s32.totalorder %s25, 1
      %p195 = por %p193, %p194
      %p197 = scmp.ne.s32.totalorder %s182, %s196
      %p198 = scmp.eq.s32.totalorder %s25, 0
      %p199 = por %p197, %p198
      %s201 = sadd.s32 %s200, 1
      %p204 = scmp.eq.s32.totalorder %s19, 1
      %p205 = scmp.ne.s32.totalorder %s200, %s202
      %p206 = scmp.eq.s32.totalorder %s19, 0
      %p207 = por %p205, %p206
      %p208 = scmp.ne.s32.totalorder %s200, %s202
      %p209 = scmp.eq.s32.totalorder %s24, 1
      %p210 = por %p208, %p209
      %p211 = scmp.ne.s32.totalorder %s202, %s203
      %p212 = scmp.eq.s32.totalorder %s24, 0
      %p213 = por %p211, %p212
      %p214 = scmp.ne.s32.totalorder %s202, %s203
      %p215 = scmp.eq.s32.totalorder %s25, 1
      %p216 = por %p214, %p215
      %p218 = scmp.ne.s32.totalorder %s203, %s217
      %p219 = scmp.eq.s32.totalorder %s25, 0
      %p220 = por %p218, %p219
      %s222 = sadd.s32 %s221, 1
      %p225 = scmp.eq.s32.totalorder %s19, 1
      %p226 = scmp.ne.s32.totalorder %s221, %s223
      %p227 = scmp.eq.s32.totalorder %s19, 0
      %p228 = por %p226, %p227
      %p229 = scmp.ne.s32.totalorder %s221, %s223
      %p230 = scmp.eq.s32.totalorder %s24, 1
      %p231 = por %p229, %p230
      %p232 = scmp.ne.s32.totalorder %s223, %s224
      %p233 = scmp.eq.s32.totalorder %s24, 0
      %p234 = por %p232, %p233
      %p235 = scmp.ne.s32.totalorder %s223, %s224
      %p236 = scmp.eq.s32.totalorder %s25, 1
      %p237 = por %p235, %p236
      %p239 = scmp.ne.s32.totalorder %s224, %s238
      %p240 = scmp.eq.s32.totalorder %s25, 0
      %p241 = por %p239, %p240
      %s243 = sadd.s32 %s242, 1
      %p246 = scmp.eq.s32.totalorder %s19, 1
      %p247 = scmp.ne.s32.totalorder %s242, %s244
      %p248 = scmp.eq.s32.totalorder %s19, 0
      %p249 = por %p247, %p248
      %p250 = scmp.ne.s32.totalorder %s242, %s244
      %p251 = scmp.eq.s32.totalorder %s24, 1
      %p252 = por %p250, %p251
      %p253 = scmp.ne.s32.totalorder %s244, %s245
      %p254 = scmp.eq.s32.totalorder %s24, 0
      %p255 = por %p253, %p254
      %p256 = scmp.ne.s32.totalorder %s244, %s245
      %p257 = scmp.eq.s32.totalorder %s25, 1
      %p258 = por %p256, %p257
      %p260 = scmp.ne.s32.totalorder %s245, %s259
      %p261 = scmp.eq.s32.totalorder %s25, 0
      %p262 = por %p260, %p261
      %s263 = ssub.s32 %s19, %s26
      %p264 = scmp.eq.s32.totalorder %s263, 0
      %s266 = sadd.s32 %s265, 1
      %s267 = scalar_select %p264, %s265, %s266
      %p270 = pneg %p264
      %p271 = scmp.eq.s32.totalorder %s19, 1
      %p272 = por %p270, %p271
      %p273 = scmp.ne.s32.totalorder %s265, %s268
      %p274 = scmp.eq.s32.totalorder %s19, 0
      %p275 = por %p273, %p274
      %p276 = scmp.ne.s32.totalorder %s265, %s268
      %p277 = scmp.eq.s32.totalorder %s24, 1
      %p278 = por %p276, %p277
      %p279 = scmp.ne.s32.totalorder %s268, %s269
      %p280 = scmp.eq.s32.totalorder %s24, 0
      %p281 = por %p279, %p280
      %p282 = scmp.ne.s32.totalorder %s268, %s269
      %p283 = scmp.eq.s32.totalorder %s25, 1
      %p284 = por %p282, %p283
      %p286 = scmp.ne.s32.totalorder %s269, %s285
      %p287 = scmp.eq.s32.totalorder %s25, 0
      %p288 = por %p286, %p287
      %p289 = scmp.le.s32.totalorder 1, %s19
      %p290 = scmp.lt.s32.totalorder %s19, 3
      %p291 = pnand %p289, %p290
      %p292 = pneg %p291
      // Predicated region
      $region9: #{tpu_custom_call.1} parent=5 // pred_check
        _
      $region10: #{tpu_custom_call.1} parent=5 // pred_check_branch
        %294 = sbr.rel (%p291) target = $region12
      $region11: #{tpu_custom_call.1} parent=5 // pred_region
        %s295 = ssub.s32 %s19, 1
        // Predicated region
        $region13: #{tpu_custom_call.1} parent=11 // pred_check
          %p296 = pneg %p66
        $region14: #{tpu_custom_call.1} parent=11 // pred_check_branch
          %298 = sbr.rel (%p296) target = $region16
        $region15: #{tpu_custom_call.1} parent=11 // pred_region
          _
        $region16: #{tpu_custom_call.1} parent=11 // pred_fallthru
          _
        // Predicated region
        $region17: #{tpu_custom_call.1} parent=11 // pred_check
          %p299 = pneg %p87
        $region18: #{tpu_custom_call.1} parent=11 // pred_check_branch
          %301 = sbr.rel (%p299) target = $region20
        $region19: #{tpu_custom_call.1} parent=11 // pred_region
          _
        $region20: #{tpu_custom_call.1} parent=11 // pred_fallthru
          _
        // Predicated region
        $region21: #{tpu_custom_call.1} parent=11 // pred_check
          %p302 = pneg %p108
        $region22: #{tpu_custom_call.1} parent=11 // pred_check_branch
          %304 = sbr.rel (%p302) target = $region24
        $region23: #{tpu_custom_call.1} parent=11 // pred_region
          _
        $region24: #{tpu_custom_call.1} parent=11 // pred_fallthru
          _
        // Predicated region
        $region25: #{tpu_custom_call.1} parent=11 // pred_check
          %p305 = pneg %p129
        $region26: #{tpu_custom_call.1} parent=11 // pred_check_branch
          %307 = sbr.rel (%p305) target = $region28
        $region27: #{tpu_custom_call.1} parent=11 // pred_region
          _
        $region28: #{tpu_custom_call.1} parent=11 // pred_fallthru
          _
        // Predicated region
        $region29: #{tpu_custom_call.1} parent=11 // pred_check
          %p308 = pneg %p150
        $region30: #{tpu_custom_call.1} parent=11 // pred_check_branch
          %310 = sbr.rel (%p308) target = $region32
        $region31: #{tpu_custom_call.1} parent=11 // pred_region
          %312 = vsyncadd [#allocation4], 0
          %s313 = sshll.u32 %s5, 4
          %s314 = int_to_ptr.hbm [resolvable:$true] %s313
          %s315 = sshll.u32 [#allocation3], 4
          %s316 = int_to_ptr.vmem [resolvable:$true] %s315
          %321 = dma.hbm_to_vmem [thread:$0]  %s314, 1536, %s316, [#allocation4], 128, 128, 8
        $region32: #{tpu_custom_call.1} parent=11 // pred_fallthru
          _
        // Predicated region
        $region33: #{tpu_custom_call.1} parent=11 // pred_check
          %p322 = pneg %p171
        $region34: #{tpu_custom_call.1} parent=11 // pred_check_branch
          %324 = sbr.rel (%p322) target = $region36
        $region35: #{tpu_custom_call.1} parent=11 // pred_region
          _
        $region36: #{tpu_custom_call.1} parent=11 // pred_fallthru
          _
        // Predicated region
        $region37: #{tpu_custom_call.1} parent=11 // pred_check
          %p325 = pneg %p192
        $region38: #{tpu_custom_call.1} parent=11 // pred_check_branch
          %327 = sbr.rel (%p325) target = $region40
        $region39: #{tpu_custom_call.1} parent=11 // pred_region
          %329 = vsyncadd [#allocation6], 0
          %s330 = sshll.u32 %s7, 4
          %s331 = int_to_ptr.hbm [resolvable:$true] %s330
          %s332 = sshll.u32 [#allocation5], 4
          %s333 = int_to_ptr.vmem [resolvable:$true] %s332
          %338 = dma.hbm_to_vmem [thread:$0]  %s331, 1024, %s333, [#allocation6], 128, 128, 8
        $region40: #{tpu_custom_call.1} parent=11 // pred_fallthru
          _
        // Predicated region
        $region41: #{tpu_custom_call.1} parent=11 // pred_check
          %p339 = pneg %p213
        $region42: #{tpu_custom_call.1} parent=11 // pred_check_branch
          %341 = sbr.rel (%p339) target = $region44
        $region43: #{tpu_custom_call.1} parent=11 // pred_region
          _
        $region44: #{tpu_custom_call.1} parent=11 // pred_fallthru
          _
        // Predicated region
        $region45: #{tpu_custom_call.1} parent=11 // pred_check
          %p342 = pneg %p234
        $region46: #{tpu_custom_call.1} parent=11 // pred_check_branch
          %344 = sbr.rel (%p342) target = $region48
        $region47: #{tpu_custom_call.1} parent=11 // pred_region
          _
        $region48: #{tpu_custom_call.1} parent=11 // pred_fallthru
          _
        // Predicated region
        $region49: #{tpu_custom_call.1} parent=11 // pred_check
          %p345 = pneg %p255
        $region50: #{tpu_custom_call.1} parent=11 // pred_check_branch
          %347 = sbr.rel (%p345) target = $region52
        $region51: #{tpu_custom_call.1} parent=11 // pred_region
          _
        $region52: #{tpu_custom_call.1} parent=11 // pred_fallthru
          _
      $region12: #{tpu_custom_call.1} parent=5 // pred_fallthru
        _
      %p348 = scmp.lt.s32.totalorder %s19, 2
      // Predicated region
      $region53: #{tpu_custom_call.1} parent=5 // pred_check
        %p349 = pneg %p348
      $region54: #{tpu_custom_call.1} parent=5 // pred_check_branch
        %351 = sbr.rel (%p349) target = $region56
      $region55: #{tpu_custom_call.1} parent=5 // pred_region
        // Predicated region
        $region57: #{tpu_custom_call.1} parent=55 // pred_check
          %p352 = pneg %p39
        $region58: #{tpu_custom_call.1} parent=55 // pred_check_branch
          %354 = sbr.rel (%p352) target = $region60
        $region59: #{tpu_custom_call.1} parent=55 // pred_region
          %p355 = scmp.lt.s32.totalorder %s19, 1
          %s356 = scalar_select %p355, %s19, 1
          %s357 = smul.addr %s356, 4
          %s358 = smul.addr %s357, 8
          %s359 = scalar_lea.vmem %s0, %s358
        $region60: #{tpu_custom_call.1} parent=55 // pred_fallthru
          _
      $region56: #{tpu_custom_call.1} parent=5 // pred_fallthru
        _
      %p360 = scmp.le.s32.totalorder 1, %s19
      %p361 = scmp.lt.s32.totalorder %s19, 3
      %p362 = pnand %p360, %p361
      %p363 = pneg %p362
      // Predicated region
      $region61: #{tpu_custom_call.1} parent=5 // pred_check
        _
      $region62: #{tpu_custom_call.1} parent=5 // pred_check_branch
        %365 = sbr.rel (%p362) target = $region64
      $region63: #{tpu_custom_call.1} parent=5 // pred_region
        %s366 = ssub.s32 %s19, 1
        // Predicated region
        $region65: #{tpu_custom_call.1} parent=63 // pred_check
          %p367 = pneg %p150
        $region66: #{tpu_custom_call.1} parent=63 // pred_check_branch
          %369 = sbr.rel (%p367) target = $region68
        $region67: #{tpu_custom_call.1} parent=63 // pred_region
          %371 = dma.done [#allocation4], 1536
        $region68: #{tpu_custom_call.1} parent=63 // pred_fallthru
          _
        // Predicated region
        $region69: #{tpu_custom_call.1} parent=63 // pred_check
          %p372 = pneg %p192
        $region70: #{tpu_custom_call.1} parent=63 // pred_check_branch
          %374 = sbr.rel (%p372) target = $region72
        $region71: #{tpu_custom_call.1} parent=63 // pred_region
          %376 = dma.done [#allocation6], 1024
        $region72: #{tpu_custom_call.1} parent=63 // pred_fallthru
          _
        %p377 = scmp.lt.s32.totalorder %s24, 1
        %s378 = scalar_select %p377, %s24, 1
        %s379 = smul.addr %s378, 4
        %s380 = smul.addr %s379, 8
        %s381 = scalar_lea.vmem %s0, %s380
        %p382 = pneg %p45
        %p383 = pneg %p42
        %p384 = pneg %p66
        %p385 = pneg %p63
        %p386 = pneg %p87
        %p387 = pneg %p84
        %p388 = pneg %p108
        %p389 = pneg %p105
        %p390 = pneg %p129
        %p391 = pneg %p126
        %p392 = pneg %p150
        %p393 = pneg %p147
        %p394 = pneg %p171
        %p395 = pneg %p168
        %p396 = pneg %p192
        %p397 = pneg %p189
        %p398 = pneg %p213
        %p399 = pneg %p210
        %p400 = pneg %p234
        %p401 = pneg %p231
        %p402 = pneg %p255
        %p403 = pneg %p252
        %p404 = pneg %p281
        %p405 = pneg %p278
        %p406 = scmp.lt.s32.totalorder %s24, 1
        %s407 = scalar_select %p406, %s24, 1
        %s408 = smul.addr %s407, 4
        %s409 = smul.addr %s408, 8
        %s410 = scalar_lea.vmem %s11, %s409
        %p411 = scmp.lt.s32.totalorder %s24, 1
        %s412 = scalar_select %p411, %s24, 1
        %s413 = smul.addr %s412, 4
        %s414 = smul.addr %s413, 8
        %s415 = scalar_lea.vmem %s0, %s414
        %p416 = scmp.lt.s32.totalorder %s24, 1
        %s417 = scalar_select %p416, %s24, 1
        %s418 = smul.addr %s417, 4
        %s419 = smul.addr %s418, 8
        %s420 = scalar_lea.vmem %s11, %s419
        %v421 = vld [vmem:[%s415] sm:$0xff]
        %v422 = vld [vmem:[%s415 + $0x8] sm:$0xff]
        %v423 = vld [vmem:[%s415 + $0x10] sm:$0xff]
        %v424 = vld [vmem:[%s415 + $0x18] sm:$0xff]
        %vm425 = vcmask 64512
        %426 = vst.msk [vmem:[#allocation2] sm:$0xff] %vm425, 0.0
        %427 = vst.msk [vmem:[#allocation2 + $0x8] sm:$0xff] %vm425, 0.0
        %428 = vst.msk [vmem:[#allocation2 + $0x10] sm:$0xff] %vm425, 0.0
        %429 = vst.msk [vmem:[#allocation2 + $0x18] sm:$0xff] %vm425, 0.0
        %430 = vst.msk [vmem:[#allocation2 + $0x20] sm:$0xff] %vm425, 0.0
        %431 = vst.msk [vmem:[#allocation2 + $0x28] sm:$0xff] %vm425, 0.0
        %v432 = vld [vmem:[%s1] sm:$0xff]
        %v433 = vld [vmem:[%s1 + $0x8] sm:$0xff]
        %v434 = vld [vmem:[%s2] sm:$0x1]
        %v436 = vperm.slane %v434, 0
        %vm438 = vcmask 130048
        %v440 = vsel %vm438, %v421, 0
        %v443 = vsel %vm438, %v422, 0
        %v446 = vsel %vm438, %v423, 0
        %v449 = vsel %vm438, %v424, 0
        %451 = vmatpush.msra.mxu0 0.0
        %452 = vmatpush.msra.mxu0 0.0
        %453 = vmatpush.msra.mxu0 0.0
        %454 = vmatpush.msra.mxu0 0.0
        %455 = vmatpush.msra.mxu0 0.0
        %456 = vmatpush.msra.mxu0 0.0
        %457 = vmatpush.msra.mxu0 0.0
        %458 = vmatpush.msra.mxu0 0.0
        %459 = vmatpush.msra.mxu0 0.0
        %460 = vmatpush.msra.mxu0 0.0
        %461 = vmatpush.msra.mxu0 0.0
        %462 = vmatpush.msra.mxu0 0.0
        %463 = vmatpush.msra.mxu0 0.0
        %464 = vmatpush.msra.mxu0 0.0
        %465 = vmatpush.msra.mxu0 %v433
        %466 = vmatpush.msra.mxu0 %v432
        %467 = vmatmul.f32.gmra.mxu0 %v440
        %v468 = vpop.f32.mrf.mxu0
        %v469 = vadd.f32 %v436, %v468
        %470 = vmatmul.f32.gmra.mxu0 %v443
        %v471 = vpop.f32.mrf.mxu0
        %v472 = vadd.f32 %v436, %v471
        %473 = vmatmul.f32.gmra.mxu0 %v446
        %v474 = vpop.f32.mrf.mxu0
        %v475 = vadd.f32 %v436, %v474
        %476 = vmatmul.f32.gmra.mxu0 %v449
        %v477 = vpop.f32.mrf.mxu0
        %v478 = vadd.f32 %v436, %v477
        %479 = vdwg.mxu0
        %480 = vst.msk [vmem:[#allocation2 + $0x8] sm:$0xff] %vm425, %v469
        %481 = vst.msk [vmem:[#allocation2 + $0x10] sm:$0xff] %vm425, %v472
        %482 = vst.msk [vmem:[#allocation2 + $0x18] sm:$0xff] %vm425, %v475
        %483 = vst.msk [vmem:[#allocation2 + $0x20] sm:$0xff] %vm425, %v478
        %v484 = vld [vmem:[%s3] sm:$0xff]
        %v485 = vld [vmem:[%s3 + $0x8] sm:$0xff]
        %v486 = vld [vmem:[%s3 + $0x10] sm:$0xff]
        %v487 = vld [vmem:[#allocation3] sm:$0xff]
        %v488 = vld [vmem:[#allocation3 + $0x8] sm:$0xff]
        %v489 = vld [vmem:[#allocation3 + $0x10] sm:$0xff]
        %v490 = vld [vmem:[#allocation5] sm:$0xff]
        %v491 = vld [vmem:[#allocation5 + $0x8] sm:$0xff]
        %v492 = vld [vmem:[%s4] sm:$0x1]
        %v493 = vld [vmem:[#allocation2] sm:$0xff]
        %v494 = vld [vmem:[#allocation2 + $0x8] sm:$0xff]
        %v495 = vld [vmem:[#allocation2 + $0x10] sm:$0xff]
        %v496 = vld [vmem:[#allocation2 + $0x18] sm:$0xff]
        %v497 = vld [vmem:[#allocation2 + $0x20] sm:$0xff]
        %v498 = vld [vmem:[#allocation2 + $0x28] sm:$0xff]
        %v500 = vsel %vm425, %v469, 0
        %v503 = vsel %vm425, %v472, 0
        %v506 = vsel %vm425, %v475, 0
        %v509 = vsel %vm425, %v478, 0
        %511 = vmatpush.msra.mxu0 0.0
        %512 = vmatpush.msra.mxu0 0.0
        %513 = vmatpush.msra.mxu0 0.0
        %514 = vmatpush.msra.mxu0 0.0
        %515 = vmatpush.msra.mxu0 0.0
        %516 = vmatpush.msra.mxu0 0.0
        %517 = vmatpush.msra.mxu0 0.0
        %518 = vmatpush.msra.mxu0 0.0
        %519 = vmatpush.msra.mxu0 0.0
        %520 = vmatpush.msra.mxu0 0.0
        %521 = vmatpush.msra.mxu0 0.0
        %522 = vmatpush.msra.mxu0 0.0
        %523 = vmatpush.msra.mxu0 0.0
        %524 = vmatpush.msra.mxu0 0.0
        %525 = vmatpush.msra.mxu0 0.0
        %526 = vmatpush.msra.mxu0 %v485
        %527 = vmatmul.f32.gmra.mxu0 %v500
        %v528 = vpop.f32.mrf.mxu0
        %v529 = vadd.f32 0.0, %v528
        %530 = vmatmul.f32.gmra.mxu0 %v503
        %v531 = vpop.f32.mrf.mxu0
        %v532 = vadd.f32 0.0, %v531
        %533 = vmatmul.f32.gmra.mxu0 %v506
        %v534 = vpop.f32.mrf.mxu0
        %v535 = vadd.f32 0.0, %v534
        %536 = vmatmul.f32.gmra.mxu0 %v509
        %v537 = vpop.f32.mrf.mxu0
        %v538 = vadd.f32 0.0, %v537
        %539 = vdwg.mxu0
        %v541 = vsel %vm425, %v493, 0
        %v544 = vsel %vm425, %v494, 0
        %v547 = vsel %vm425, %v495, 0
        %v550 = vsel %vm425, %v496, 0
        %552 = vmatpush.msra.mxu0 0.0
        %553 = vmatpush.msra.mxu0 0.0
        %554 = vmatpush.msra.mxu0 0.0
        %555 = vmatpush.msra.mxu0 0.0
        %556 = vmatpush.msra.mxu0 0.0
        %557 = vmatpush.msra.mxu0 0.0
        %558 = vmatpush.msra.mxu0 0.0
        %559 = vmatpush.msra.mxu0 0.0
        %560 = vmatpush.msra.mxu0 0.0
        %561 = vmatpush.msra.mxu0 0.0
        %562 = vmatpush.msra.mxu0 0.0
        %563 = vmatpush.msra.mxu0 0.0
        %564 = vmatpush.msra.mxu0 0.0
        %565 = vmatpush.msra.mxu0 0.0
        %566 = vmatpush.msra.mxu0 0.0
        %567 = vmatpush.msra.mxu0 %v484
        %568 = vmatmul.f32.gmra.mxu0 %v541
        %v569 = vpop.f32.mrf.mxu0
        %v570 = vadd.f32 %v529, %v569
        %571 = vmatmul.f32.gmra.mxu0 %v544
        %v572 = vpop.f32.mrf.mxu0
        %v573 = vadd.f32 %v532, %v572
        %574 = vmatmul.f32.gmra.mxu0 %v547
        %v575 = vpop.f32.mrf.mxu0
        %v576 = vadd.f32 %v535, %v575
        %577 = vmatmul.f32.gmra.mxu0 %v550
        %v578 = vpop.f32.mrf.mxu0
        %v579 = vadd.f32 %v538, %v578
        %580 = vdwg.mxu0
        %v582 = vsel %vm425, %v497, 0
        %v585 = vsel %vm425, %v498, 0
        %587 = vmatpush.msra.mxu0 0.0
        %588 = vmatpush.msra.mxu0 0.0
        %589 = vmatpush.msra.mxu0 0.0
        %590 = vmatpush.msra.mxu0 0.0
        %591 = vmatpush.msra.mxu0 0.0
        %592 = vmatpush.msra.mxu0 0.0
        %593 = vmatpush.msra.mxu0 0.0
        %594 = vmatpush.msra.mxu0 0.0
        %595 = vmatpush.msra.mxu0 0.0
        %596 = vmatpush.msra.mxu0 0.0
        %597 = vmatpush.msra.mxu0 0.0
        %598 = vmatpush.msra.mxu0 0.0
        %599 = vmatpush.msra.mxu0 0.0
        %600 = vmatpush.msra.mxu0 0.0
        %601 = vmatpush.msra.mxu0 0.0
        %602 = vmatpush.msra.mxu0 %v486
        %603 = vmatmul.f32.gmra.mxu0 %v547
        %v604 = vpop.f32.mrf.mxu0
        %v605 = vadd.f32 0.0, %v604
        %606 = vmatmul.f32.gmra.mxu0 %v550
        %v607 = vpop.f32.mrf.mxu0
        %v608 = vadd.f32 0.0, %v607
        %609 = vmatmul.f32.gmra.mxu0 %v582
        %v610 = vpop.f32.mrf.mxu0
        %v611 = vadd.f32 0.0, %v610
        %612 = vmatmul.f32.gmra.mxu0 %v585
        %v613 = vpop.f32.mrf.mxu0
        %v614 = vadd.f32 0.0, %v613
        %615 = vdwg.mxu0
        %v616 = vadd.f32 %v570, %v605
        %v617 = vadd.f32 %v573, %v608
        %v618 = vadd.f32 %v576, %v611
        %v619 = vadd.f32 %v579, %v614
        %v621 = vperm.slane %v492, 0
        %v623 = vadd.f32 %v616, %v621
        %v624 = vadd.f32 %v617, %v621
        %v625 = vadd.f32 %v618, %v621
        %v626 = vadd.f32 %v619, %v621
        %v627 = vld [vmem:[%s6] sm:$0x1]
        %v628 = vld [vmem:[#allocation2 + $0x7] sm:$0xff]
        %v629 = vld [vmem:[#allocation2 + $0xf] sm:$0xff]
        %v630 = vld [vmem:[#allocation2 + $0x17] sm:$0xff]
        %v631 = vld [vmem:[#allocation2 + $0x1f] sm:$0xff]
        %v632 = vld [vmem:[#allocation2 + $0x9] sm:$0xff]
        %v633 = vld [vmem:[#allocation2 + $0x11] sm:$0xff]
        %v634 = vld [vmem:[#allocation2 + $0x19] sm:$0xff]
        %v635 = vld [vmem:[#allocation2 + $0x21] sm:$0xff]
        %636 = vmatpush.msra.mxu0 0.0
        %637 = vmatpush.msra.mxu0 0.0
        %638 = vmatpush.msra.mxu0 0.0
        %639 = vmatpush.msra.mxu0 0.0
        %640 = vmatpush.msra.mxu0 0.0
        %641 = vmatpush.msra.mxu0 0.0
        %642 = vmatpush.msra.mxu0 0.0
        %643 = vmatpush.msra.mxu0 0.0
        %644 = vmatpush.msra.mxu0 0.0
        %645 = vmatpush.msra.mxu0 0.0
        %646 = vmatpush.msra.mxu0 0.0
        %647 = vmatpush.msra.mxu0 0.0
        %648 = vmatpush.msra.mxu0 0.0
        %649 = vmatpush.msra.mxu0 0.0
        %650 = vmatpush.msra.mxu0 0.0
        %651 = vmatpush.msra.mxu0 %v488
        %652 = vmatmul.f32.gmra.mxu0 %v500
        %v653 = vpop.f32.mrf.mxu0
        %v654 = vadd.f32 0.0, %v653
        %655 = vmatmul.f32.gmra.mxu0 %v503
        %v656 = vpop.f32.mrf.mxu0
        %v657 = vadd.f32 0.0, %v656
        %658 = vmatmul.f32.gmra.mxu0 %v506
        %v659 = vpop.f32.mrf.mxu0
        %v660 = vadd.f32 0.0, %v659
        %661 = vmatmul.f32.gmra.mxu0 %v509
        %v662 = vpop.f32.mrf.mxu0
        %v663 = vadd.f32 0.0, %v662
        %664 = vdwg.mxu0
        %v666 = vsel %vm425, %v628, 0
        %v669 = vsel %vm425, %v629, 0
        %v672 = vsel %vm425, %v630, 0
        %v675 = vsel %vm425, %v631, 0
        %677 = vmatpush.msra.mxu0 0.0
        %678 = vmatpush.msra.mxu0 0.0
        %679 = vmatpush.msra.mxu0 0.0
        %680 = vmatpush.msra.mxu0 0.0
        %681 = vmatpush.msra.mxu0 0.0
        %682 = vmatpush.msra.mxu0 0.0
        %683 = vmatpush.msra.mxu0 0.0
        %684 = vmatpush.msra.mxu0 0.0
        %685 = vmatpush.msra.mxu0 0.0
        %686 = vmatpush.msra.mxu0 0.0
        %687 = vmatpush.msra.mxu0 0.0
        %688 = vmatpush.msra.mxu0 0.0
        %689 = vmatpush.msra.mxu0 0.0
        %690 = vmatpush.msra.mxu0 0.0
        %691 = vmatpush.msra.mxu0 0.0
        %692 = vmatpush.msra.mxu0 %v487
        %693 = vmatmul.f32.gmra.mxu0 %v666
        %v694 = vpop.f32.mrf.mxu0
        %v695 = vadd.f32 %v654, %v694
        %696 = vmatmul.f32.gmra.mxu0 %v669
        %v697 = vpop.f32.mrf.mxu0
        %v698 = vadd.f32 %v657, %v697
        %699 = vmatmul.f32.gmra.mxu0 %v672
        %v700 = vpop.f32.mrf.mxu0
        %v701 = vadd.f32 %v660, %v700
        %702 = vmatmul.f32.gmra.mxu0 %v675
        %v703 = vpop.f32.mrf.mxu0
        %v704 = vadd.f32 %v663, %v703
        %705 = vdwg.mxu0
        %v707 = vsel %vm425, %v632, 0
        %v710 = vsel %vm425, %v633, 0
        %v713 = vsel %vm425, %v634, 0
        %v716 = vsel %vm425, %v635, 0
        %718 = vmatpush.msra.mxu0 0.0
        %719 = vmatpush.msra.mxu0 0.0
        %720 = vmatpush.msra.mxu0 0.0
        %721 = vmatpush.msra.mxu0 0.0
        %722 = vmatpush.msra.mxu0 0.0
        %723 = vmatpush.msra.mxu0 0.0
        %724 = vmatpush.msra.mxu0 0.0
        %725 = vmatpush.msra.mxu0 0.0
        %726 = vmatpush.msra.mxu0 0.0
        %727 = vmatpush.msra.mxu0 0.0
        %728 = vmatpush.msra.mxu0 0.0
        %729 = vmatpush.msra.mxu0 0.0
        %730 = vmatpush.msra.mxu0 0.0
        %731 = vmatpush.msra.mxu0 0.0
        %732 = vmatpush.msra.mxu0 0.0
        %733 = vmatpush.msra.mxu0 %v489
        %734 = vmatmul.f32.gmra.mxu0 %v707
        %v735 = vpop.f32.mrf.mxu0
        %v736 = vadd.f32 0.0, %v735
        %737 = vmatmul.f32.gmra.mxu0 %v710
        %v738 = vpop.f32.mrf.mxu0
        %v739 = vadd.f32 0.0, %v738
        %740 = vmatmul.f32.gmra.mxu0 %v713
        %v741 = vpop.f32.mrf.mxu0
        %v742 = vadd.f32 0.0, %v741
        %743 = vmatmul.f32.gmra.mxu0 %v716
        %v744 = vpop.f32.mrf.mxu0
        %v745 = vadd.f32 0.0, %v744
        %746 = vdwg.mxu0
        %v747 = vadd.f32 %v695, %v736
        %v748 = vadd.f32 %v698, %v739
        %v749 = vadd.f32 %v701, %v742
        %v750 = vadd.f32 %v704, %v745
        %v752 = vperm.slane %v627, 0
        %v754 = vadd.f32 %v747, %v752
        %v755 = vadd.f32 %v748, %v752
        %v756 = vadd.f32 %v749, %v752
        %v757 = vadd.f32 %v750, %v752
        %v759 = vsel %vm425, %v754, 0
        %v762 = vsel %vm425, %v755, 0
        %v765 = vsel %vm425, %v756, 0
        %v768 = vsel %vm425, %v757, 0
        %770 = vmatpush.msra.mxu0 0.0
        %771 = vmatpush.msra.mxu0 0.0
        %772 = vmatpush.msra.mxu0 0.0
        %773 = vmatpush.msra.mxu0 0.0
        %774 = vmatpush.msra.mxu0 0.0
        %775 = vmatpush.msra.mxu0 0.0
        %776 = vmatpush.msra.mxu0 0.0
        %777 = vmatpush.msra.mxu0 0.0
        %778 = vmatpush.msra.mxu0 0.0
        %779 = vmatpush.msra.mxu0 0.0
        %780 = vmatpush.msra.mxu0 0.0
        %781 = vmatpush.msra.mxu0 0.0
        %782 = vmatpush.msra.mxu0 0.0
        %783 = vmatpush.msra.mxu0 0.0
        %784 = vmatpush.msra.mxu0 0.0
        %785 = vmatpush.msra.mxu0 %v491
        %786 = vmatmul.f32.gmra.mxu0 %v759
        %v787 = vpop.f32.mrf.mxu0
        %v788 = vadd.f32 0.0, %v787
        %789 = vmatmul.f32.gmra.mxu0 %v762
        %v790 = vpop.f32.mrf.mxu0
        %v791 = vadd.f32 0.0, %v790
        %792 = vmatmul.f32.gmra.mxu0 %v765
        %v793 = vpop.f32.mrf.mxu0
        %v794 = vadd.f32 0.0, %v793
        %795 = vmatmul.f32.gmra.mxu0 %v768
        %v796 = vpop.f32.mrf.mxu0
        %v797 = vadd.f32 0.0, %v796
        %798 = vdwg.mxu0
        %v800 = vsel %vm425, %v623, 0
        %v803 = vsel %vm425, %v624, 0
        %v806 = vsel %vm425, %v625, 0
        %v809 = vsel %vm425, %v626, 0
        %811 = vmatpush.msra.mxu0 0.0
        %812 = vmatpush.msra.mxu0 0.0
        %813 = vmatpush.msra.mxu0 0.0
        %814 = vmatpush.msra.mxu0 0.0
        %815 = vmatpush.msra.mxu0 0.0
        %816 = vmatpush.msra.mxu0 0.0
        %817 = vmatpush.msra.mxu0 0.0
        %818 = vmatpush.msra.mxu0 0.0
        %819 = vmatpush.msra.mxu0 0.0
        %820 = vmatpush.msra.mxu0 0.0
        %821 = vmatpush.msra.mxu0 0.0
        %822 = vmatpush.msra.mxu0 0.0
        %823 = vmatpush.msra.mxu0 0.0
        %824 = vmatpush.msra.mxu0 0.0
        %825 = vmatpush.msra.mxu0 0.0
        %826 = vmatpush.msra.mxu0 %v490
        %827 = vmatmul.f32.gmra.mxu0 %v800
        %v828 = vpop.f32.mrf.mxu0
        %v829 = vadd.f32 %v788, %v828
        %830 = vmatmul.f32.gmra.mxu0 %v803
        %v831 = vpop.f32.mrf.mxu0
        %v832 = vadd.f32 %v791, %v831
        %833 = vmatmul.f32.gmra.mxu0 %v806
        %v834 = vpop.f32.mrf.mxu0
        %v835 = vadd.f32 %v794, %v834
        %836 = vmatmul.f32.gmra.mxu0 %v809
        %v837 = vpop.f32.mrf.mxu0
        %v838 = vadd.f32 %v797, %v837
        %839 = vdwg.mxu0
        %v840 = vld [vmem:[%s8] sm:$0x1]
        %v842 = vperm.slane %v840, 0
        %v844 = vadd.f32 %v829, %v842
        %v845 = vadd.f32 %v832, %v842
        %v846 = vadd.f32 %v835, %v842
        %v847 = vadd.f32 %v838, %v842
        %v848 = vmax.f32 %v844, 0.0
        %v849 = vmax.f32 %v845, 0.0
        %v850 = vmax.f32 %v846, 0.0
        %v851 = vmax.f32 %v847, 0.0
        %v852 = vadd.f32 %v469, %v848
        %v853 = vadd.f32 %v472, %v849
        %v854 = vadd.f32 %v475, %v850
        %v855 = vadd.f32 %v478, %v851
        %856 = vst.msk [vmem:[#allocation2 + $0x8] sm:$0xff] %vm425, %v852
        %857 = vst.msk [vmem:[#allocation2 + $0x10] sm:$0xff] %vm425, %v853
        %858 = vst.msk [vmem:[#allocation2 + $0x18] sm:$0xff] %vm425, %v854
        %859 = vst.msk [vmem:[#allocation2 + $0x20] sm:$0xff] %vm425, %v855
        %s860 = scalar_lea.vmem %s3, 24
        %v861 = vld [vmem:[%s860] sm:$0xff]
        %v862 = vld [vmem:[%s860 + $0x8] sm:$0xff]
        %v863 = vld [vmem:[%s860 + $0x10] sm:$0xff]
        %s864 = scalar_lea.vmem [#allocation3], 24
        %v865 = vld [vmem:[%s864] sm:$0xff]
        %v866 = vld [vmem:[%s864 + $0x8] sm:$0xff]
        %v867 = vld [vmem:[%s864 + $0x10] sm:$0xff]
        %s868 = scalar_lea.vmem [#allocation5], 16
        %v869 = vld [vmem:[%s868] sm:$0xff]
        %v870 = vld [vmem:[%s868 + $0x8] sm:$0xff]
        %s871 = scalar_lea.vmem %s4, 1
        %v872 = vld [vmem:[%s871] sm:$0x1]
        %v873 = vld [vmem:[#allocation2 + $0x4] sm:$0xff]
        %v874 = vld [vmem:[#allocation2 + $0xc] sm:$0xff]
        %v875 = vld [vmem:[#allocation2 + $0x14] sm:$0xff]
        %v876 = vld [vmem:[#allocation2 + $0x1c] sm:$0xff]
        %v877 = vld [vmem:[#allocation2 + $0x24] sm:$0xff]
        %v879 = vsel %vm425, %v852, 0
        %v882 = vsel %vm425, %v853, 0
        %v885 = vsel %vm425, %v854, 0
        %v888 = vsel %vm425, %v855, 0
        %890 = vmatpush.msra.mxu0 0.0
        %891 = vmatpush.msra.mxu0 0.0
        %892 = vmatpush.msra.mxu0 0.0
        %893 = vmatpush.msra.mxu0 0.0
        %894 = vmatpush.msra.mxu0 0.0
        %895 = vmatpush.msra.mxu0 0.0
        %896 = vmatpush.msra.mxu0 0.0
        %897 = vmatpush.msra.mxu0 0.0
        %898 = vmatpush.msra.mxu0 0.0
        %899 = vmatpush.msra.mxu0 0.0
        %900 = vmatpush.msra.mxu0 0.0
        %901 = vmatpush.msra.mxu0 0.0
        %902 = vmatpush.msra.mxu0 0.0
        %903 = vmatpush.msra.mxu0 0.0
        %904 = vmatpush.msra.mxu0 0.0
        %905 = vmatpush.msra.mxu0 %v862
        %906 = vmatmul.f32.gmra.mxu0 %v879
        %v907 = vpop.f32.mrf.mxu0
        %v908 = vadd.f32 0.0, %v907
        %909 = vmatmul.f32.gmra.mxu0 %v882
        %v910 = vpop.f32.mrf.mxu0
        %v911 = vadd.f32 0.0, %v910
        %912 = vmatmul.f32.gmra.mxu0 %v885
        %v913 = vpop.f32.mrf.mxu0
        %v914 = vadd.f32 0.0, %v913
        %915 = vmatmul.f32.gmra.mxu0 %v888
        %v916 = vpop.f32.mrf.mxu0
        %v917 = vadd.f32 0.0, %v916
        %918 = vdwg.mxu0
        %v920 = vsel %vm425, %v873, 0
        %v923 = vsel %vm425, %v874, 0
        %v926 = vsel %vm425, %v875, 0
        %v929 = vsel %vm425, %v876, 0
        %931 = vmatpush.msra.mxu0 0.0
        %932 = vmatpush.msra.mxu0 0.0
        %933 = vmatpush.msra.mxu0 0.0
        %934 = vmatpush.msra.mxu0 0.0
        %935 = vmatpush.msra.mxu0 0.0
        %936 = vmatpush.msra.mxu0 0.0
        %937 = vmatpush.msra.mxu0 0.0
        %938 = vmatpush.msra.mxu0 0.0
        %939 = vmatpush.msra.mxu0 0.0
        %940 = vmatpush.msra.mxu0 0.0
        %941 = vmatpush.msra.mxu0 0.0
        %942 = vmatpush.msra.mxu0 0.0
        %943 = vmatpush.msra.mxu0 0.0
        %944 = vmatpush.msra.mxu0 0.0
        %945 = vmatpush.msra.mxu0 0.0
        %946 = vmatpush.msra.mxu0 %v861
        %947 = vmatmul.f32.gmra.mxu0 %v920
        %v948 = vpop.f32.mrf.mxu0
        %v949 = vadd.f32 %v908, %v948
        %950 = vmatmul.f32.gmra.mxu0 %v923
        %v951 = vpop.f32.mrf.mxu0
        %v952 = vadd.f32 %v911, %v951
        %953 = vmatmul.f32.gmra.mxu0 %v926
        %v954 = vpop.f32.mrf.mxu0
        %v955 = vadd.f32 %v914, %v954
        %956 = vmatmul.f32.gmra.mxu0 %v929
        %v957 = vpop.f32.mrf.mxu0
        %v958 = vadd.f32 %v917, %v957
        %959 = vdwg.mxu0
        %v961 = vsel %vm425, %v877, 0
        %963 = vmatpush.msra.mxu0 0.0
        %964 = vmatpush.msra.mxu0 0.0
        %965 = vmatpush.msra.mxu0 0.0
        %966 = vmatpush.msra.mxu0 0.0
        %967 = vmatpush.msra.mxu0 0.0
        %968 = vmatpush.msra.mxu0 0.0
        %969 = vmatpush.msra.mxu0 0.0
        %970 = vmatpush.msra.mxu0 0.0
        %971 = vmatpush.msra.mxu0 0.0
        %972 = vmatpush.msra.mxu0 0.0
        %973 = vmatpush.msra.mxu0 0.0
        %974 = vmatpush.msra.mxu0 0.0
        %975 = vmatpush.msra.mxu0 0.0
        %976 = vmatpush.msra.mxu0 0.0
        %977 = vmatpush.msra.mxu0 0.0
        %978 = vmatpush.msra.mxu0 %v863
        %979 = vmatmul.f32.gmra.mxu0 %v923
        %v980 = vpop.f32.mrf.mxu0
        %v981 = vadd.f32 0.0, %v980
        %982 = vmatmul.f32.gmra.mxu0 %v926
        %v983 = vpop.f32.mrf.mxu0
        %v984 = vadd.f32 0.0, %v983
        %985 = vmatmul.f32.gmra.mxu0 %v929
        %v986 = vpop.f32.mrf.mxu0
        %v987 = vadd.f32 0.0, %v986
        %988 = vmatmul.f32.gmra.mxu0 %v961
        %v989 = vpop.f32.mrf.mxu0
        %v990 = vadd.f32 0.0, %v989
        %991 = vdwg.mxu0
        %v992 = vadd.f32 %v949, %v981
        %v993 = vadd.f32 %v952, %v984
        %v994 = vadd.f32 %v955, %v987
        %v995 = vadd.f32 %v958, %v990
        %v997 = vperm.slane %v872, 0
        %v999 = vadd.f32 %v992, %v997
        %v1000 = vadd.f32 %v993, %v997
        %v1001 = vadd.f32 %v994, %v997
        %v1002 = vadd.f32 %v995, %v997
        %s1003 = scalar_lea.vmem %s6, 1
        %v1004 = vld [vmem:[%s1003] sm:$0x1]
        %v1005 = vld [vmem:[#allocation2 + $0x6] sm:$0xff]
        %v1006 = vld [vmem:[#allocation2 + $0xe] sm:$0xff]
        %v1007 = vld [vmem:[#allocation2 + $0x16] sm:$0xff]
        %v1008 = vld [vmem:[#allocation2 + $0x1e] sm:$0xff]
        %v1009 = vld [vmem:[#allocation2 + $0xa] sm:$0xff]
        %v1010 = vld [vmem:[#allocation2 + $0x12] sm:$0xff]
        %v1011 = vld [vmem:[#allocation2 + $0x1a] sm:$0xff]
        %v1012 = vld [vmem:[#allocation2 + $0x22] sm:$0xff]
        %1013 = vmatpush.msra.mxu0 0.0
        %1014 = vmatpush.msra.mxu0 0.0
        %1015 = vmatpush.msra.mxu0 0.0
        %1016 = vmatpush.msra.mxu0 0.0
        %1017 = vmatpush.msra.mxu0 0.0
        %1018 = vmatpush.msra.mxu0 0.0
        %1019 = vmatpush.msra.mxu0 0.0
        %1020 = vmatpush.msra.mxu0 0.0
        %1021 = vmatpush.msra.mxu0 0.0
        %1022 = vmatpush.msra.mxu0 0.0
        %1023 = vmatpush.msra.mxu0 0.0
        %1024 = vmatpush.msra.mxu0 0.0
        %1025 = vmatpush.msra.mxu0 0.0
        %1026 = vmatpush.msra.mxu0 0.0
        %1027 = vmatpush.msra.mxu0 0.0
        %1028 = vmatpush.msra.mxu0 %v866
        %1029 = vmatmul.f32.gmra.mxu0 %v879
        %v1030 = vpop.f32.mrf.mxu0
        %v1031 = vadd.f32 0.0, %v1030
        %1032 = vmatmul.f32.gmra.mxu0 %v882
        %v1033 = vpop.f32.mrf.mxu0
        %v1034 = vadd.f32 0.0, %v1033
        %1035 = vmatmul.f32.gmra.mxu0 %v885
        %v1036 = vpop.f32.mrf.mxu0
        %v1037 = vadd.f32 0.0, %v1036
        %1038 = vmatmul.f32.gmra.mxu0 %v888
        %v1039 = vpop.f32.mrf.mxu0
        %v1040 = vadd.f32 0.0, %v1039
        %1041 = vdwg.mxu0
        %v1043 = vsel %vm425, %v1005, 0
        %v1046 = vsel %vm425, %v1006, 0
        %v1049 = vsel %vm425, %v1007, 0
        %v1052 = vsel %vm425, %v1008, 0
        %1054 = vmatpush.msra.mxu0 0.0
        %1055 = vmatpush.msra.mxu0 0.0
        %1056 = vmatpush.msra.mxu0 0.0
        %1057 = vmatpush.msra.mxu0 0.0
        %1058 = vmatpush.msra.mxu0 0.0
        %1059 = vmatpush.msra.mxu0 0.0
        %1060 = vmatpush.msra.mxu0 0.0
        %1061 = vmatpush.msra.mxu0 0.0
        %1062 = vmatpush.msra.mxu0 0.0
        %1063 = vmatpush.msra.mxu0 0.0
        %1064 = vmatpush.msra.mxu0 0.0
        %1065 = vmatpush.msra.mxu0 0.0
        %1066 = vmatpush.msra.mxu0 0.0
        %1067 = vmatpush.msra.mxu0 0.0
        %1068 = vmatpush.msra.mxu0 0.0
        %1069 = vmatpush.msra.mxu0 %v865
        %1070 = vmatmul.f32.gmra.mxu0 %v1043
        %v1071 = vpop.f32.mrf.mxu0
        %v1072 = vadd.f32 %v1031, %v1071
        %1073 = vmatmul.f32.gmra.mxu0 %v1046
        %v1074 = vpop.f32.mrf.mxu0
        %v1075 = vadd.f32 %v1034, %v1074
        %1076 = vmatmul.f32.gmra.mxu0 %v1049
        %v1077 = vpop.f32.mrf.mxu0
        %v1078 = vadd.f32 %v1037, %v1077
        %1079 = vmatmul.f32.gmra.mxu0 %v1052
        %v1080 = vpop.f32.mrf.mxu0
        %v1081 = vadd.f32 %v1040, %v1080
        %1082 = vdwg.mxu0
        %v1084 = vsel %vm425, %v1009, 0
        %v1087 = vsel %vm425, %v1010, 0
        %v1090 = vsel %vm425, %v1011, 0
        %v1093 = vsel %vm425, %v1012, 0
        %1095 = vmatpush.msra.mxu0 0.0
        %1096 = vmatpush.msra.mxu0 0.0
        %1097 = vmatpush.msra.mxu0 0.0
        %1098 = vmatpush.msra.mxu0 0.0
        %1099 = vmatpush.msra.mxu0 0.0
        %1100 = vmatpush.msra.mxu0 0.0
        %1101 = vmatpush.msra.mxu0 0.0
        %1102 = vmatpush.msra.mxu0 0.0
        %1103 = vmatpush.msra.mxu0 0.0
        %1104 = vmatpush.msra.mxu0 0.0
        %1105 = vmatpush.msra.mxu0 0.0
        %1106 = vmatpush.msra.mxu0 0.0
        %1107 = vmatpush.msra.mxu0 0.0
        %1108 = vmatpush.msra.mxu0 0.0
        %1109 = vmatpush.msra.mxu0 0.0
        %1110 = vmatpush.msra.mxu0 %v867
        %1111 = vmatmul.f32.gmra.mxu0 %v1084
        %v1112 = vpop.f32.mrf.mxu0
        %v1113 = vadd.f32 0.0, %v1112
        %1114 = vmatmul.f32.gmra.mxu0 %v1087
        %v1115 = vpop.f32.mrf.mxu0
        %v1116 = vadd.f32 0.0, %v1115
        %1117 = vmatmul.f32.gmra.mxu0 %v1090
        %v1118 = vpop.f32.mrf.mxu0
        %v1119 = vadd.f32 0.0, %v1118
        %1120 = vmatmul.f32.gmra.mxu0 %v1093
        %v1121 = vpop.f32.mrf.mxu0
        %v1122 = vadd.f32 0.0, %v1121
        %1123 = vdwg.mxu0
        %v1124 = vadd.f32 %v1072, %v1113
        %v1125 = vadd.f32 %v1075, %v1116
        %v1126 = vadd.f32 %v1078, %v1119
        %v1127 = vadd.f32 %v1081, %v1122
        %v1129 = vperm.slane %v1004, 0
        %v1131 = vadd.f32 %v1124, %v1129
        %v1132 = vadd.f32 %v1125, %v1129
        %v1133 = vadd.f32 %v1126, %v1129
        %v1134 = vadd.f32 %v1127, %v1129
        %v1136 = vsel %vm425, %v1131, 0
        %v1139 = vsel %vm425, %v1132, 0
        %v1142 = vsel %vm425, %v1133, 0
        %v1145 = vsel %vm425, %v1134, 0
        %1147 = vmatpush.msra.mxu0 0.0
        %1148 = vmatpush.msra.mxu0 0.0
        %1149 = vmatpush.msra.mxu0 0.0
        %1150 = vmatpush.msra.mxu0 0.0
        %1151 = vmatpush.msra.mxu0 0.0
        %1152 = vmatpush.msra.mxu0 0.0
        %1153 = vmatpush.msra.mxu0 0.0
        %1154 = vmatpush.msra.mxu0 0.0
        %1155 = vmatpush.msra.mxu0 0.0
        %1156 = vmatpush.msra.mxu0 0.0
        %1157 = vmatpush.msra.mxu0 0.0
        %1158 = vmatpush.msra.mxu0 0.0
        %1159 = vmatpush.msra.mxu0 0.0
        %1160 = vmatpush.msra.mxu0 0.0
        %1161 = vmatpush.msra.mxu0 0.0
        %1162 = vmatpush.msra.mxu0 %v870
        %1163 = vmatmul.f32.gmra.mxu0 %v1136
        %v1164 = vpop.f32.mrf.mxu0
        %v1165 = vadd.f32 0.0, %v1164
        %1166 = vmatmul.f32.gmra.mxu0 %v1139
        %v1167 = vpop.f32.mrf.mxu0
        %v1168 = vadd.f32 0.0, %v1167
        %1169 = vmatmul.f32.gmra.mxu0 %v1142
        %v1170 = vpop.f32.mrf.mxu0
        %v1171 = vadd.f32 0.0, %v1170
        %1172 = vmatmul.f32.gmra.mxu0 %v1145
        %v1173 = vpop.f32.mrf.mxu0
        %v1174 = vadd.f32 0.0, %v1173
        %1175 = vdwg.mxu0
        %v1177 = vsel %vm425, %v999, 0
        %v1180 = vsel %vm425, %v1000, 0
        %v1183 = vsel %vm425, %v1001, 0
        %v1186 = vsel %vm425, %v1002, 0
        %1188 = vmatpush.msra.mxu0 0.0
        %1189 = vmatpush.msra.mxu0 0.0
        %1190 = vmatpush.msra.mxu0 0.0
        %1191 = vmatpush.msra.mxu0 0.0
        %1192 = vmatpush.msra.mxu0 0.0
        %1193 = vmatpush.msra.mxu0 0.0
        %1194 = vmatpush.msra.mxu0 0.0
        %1195 = vmatpush.msra.mxu0 0.0
        %1196 = vmatpush.msra.mxu0 0.0
        %1197 = vmatpush.msra.mxu0 0.0
        %1198 = vmatpush.msra.mxu0 0.0
        %1199 = vmatpush.msra.mxu0 0.0
        %1200 = vmatpush.msra.mxu0 0.0
        %1201 = vmatpush.msra.mxu0 0.0
        %1202 = vmatpush.msra.mxu0 0.0
        %1203 = vmatpush.msra.mxu0 %v869
        %1204 = vmatmul.f32.gmra.mxu0 %v1177
        %v1205 = vpop.f32.mrf.mxu0
        %v1206 = vadd.f32 %v1165, %v1205
        %1207 = vmatmul.f32.gmra.mxu0 %v1180
        %v1208 = vpop.f32.mrf.mxu0
        %v1209 = vadd.f32 %v1168, %v1208
        %1210 = vmatmul.f32.gmra.mxu0 %v1183
        %v1211 = vpop.f32.mrf.mxu0
        %v1212 = vadd.f32 %v1171, %v1211
        %1213 = vmatmul.f32.gmra.mxu0 %v1186
        %v1214 = vpop.f32.mrf.mxu0
        %v1215 = vadd.f32 %v1174, %v1214
        %1216 = vdwg.mxu0
        %s1217 = scalar_lea.vmem %s8, 1
        %v1218 = vld [vmem:[%s1217] sm:$0x1]
        %v1220 = vperm.slane %v1218, 0
        %v1222 = vadd.f32 %v1206, %v1220
        %v1223 = vadd.f32 %v1209, %v1220
        %v1224 = vadd.f32 %v1212, %v1220
        %v1225 = vadd.f32 %v1215, %v1220
        %v1226 = vmax.f32 %v1222, 0.0
        %v1227 = vmax.f32 %v1223, 0.0
        %v1228 = vmax.f32 %v1224, 0.0
        %v1229 = vmax.f32 %v1225, 0.0
        %v1230 = vadd.f32 %v852, %v1226
        %v1231 = vadd.f32 %v853, %v1227
        %v1232 = vadd.f32 %v854, %v1228
        %v1233 = vadd.f32 %v855, %v1229
        %1234 = vst.msk [vmem:[#allocation2 + $0x8] sm:$0xff] %vm425, %v1230
        %1235 = vst.msk [vmem:[#allocation2 + $0x10] sm:$0xff] %vm425, %v1231
        %1236 = vst.msk [vmem:[#allocation2 + $0x18] sm:$0xff] %vm425, %v1232
        %1237 = vst.msk [vmem:[#allocation2 + $0x20] sm:$0xff] %vm425, %v1233
        %s1238 = scalar_lea.vmem %s3, 48
        %v1239 = vld [vmem:[%s1238] sm:$0xff]
        %v1240 = vld [vmem:[%s1238 + $0x8] sm:$0xff]
        %v1241 = vld [vmem:[%s1238 + $0x10] sm:$0xff]
        %s1242 = scalar_lea.vmem [#allocation3], 48
        %v1243 = vld [vmem:[%s1242] sm:$0xff]
        %v1244 = vld [vmem:[%s1242 + $0x8] sm:$0xff]
        %v1245 = vld [vmem:[%s1242 + $0x10] sm:$0xff]
        %s1246 = scalar_lea.vmem [#allocation5], 32
        %v1247 = vld [vmem:[%s1246] sm:$0xff]
        %v1248 = vld [vmem:[%s1246 + $0x8] sm:$0xff]
        %s1249 = scalar_lea.vmem %s4, 2
        %v1250 = vld [vmem:[%s1249] sm:$0x1]
        %v1251 = vld [vmem:[#allocation2 + $0x6] sm:$0xff]
        %v1252 = vld [vmem:[#allocation2 + $0xe] sm:$0xff]
        %v1253 = vld [vmem:[#allocation2 + $0x16] sm:$0xff]
        %v1254 = vld [vmem:[#allocation2 + $0x1e] sm:$0xff]
        %v1255 = vld [vmem:[#allocation2 + $0xa] sm:$0xff]
        %v1256 = vld [vmem:[#allocation2 + $0x12] sm:$0xff]
        %v1257 = vld [vmem:[#allocation2 + $0x1a] sm:$0xff]
        %v1258 = vld [vmem:[#allocation2 + $0x22] sm:$0xff]
        %v1260 = vsel %vm425, %v1230, 0
        %v1263 = vsel %vm425, %v1231, 0
        %v1266 = vsel %vm425, %v1232, 0
        %v1269 = vsel %vm425, %v1233, 0
        %1271 = vmatpush.msra.mxu0 0.0
        %1272 = vmatpush.msra.mxu0 0.0
        %1273 = vmatpush.msra.mxu0 0.0
        %1274 = vmatpush.msra.mxu0 0.0
        %1275 = vmatpush.msra.mxu0 0.0
        %1276 = vmatpush.msra.mxu0 0.0
        %1277 = vmatpush.msra.mxu0 0.0
        %1278 = vmatpush.msra.mxu0 0.0
        %1279 = vmatpush.msra.mxu0 0.0
        %1280 = vmatpush.msra.mxu0 0.0
        %1281 = vmatpush.msra.mxu0 0.0
        %1282 = vmatpush.msra.mxu0 0.0
        %1283 = vmatpush.msra.mxu0 0.0
        %1284 = vmatpush.msra.mxu0 0.0
        %1285 = vmatpush.msra.mxu0 0.0
        %1286 = vmatpush.msra.mxu0 %v1240
        %1287 = vmatmul.f32.gmra.mxu0 %v1260
        %v1288 = vpop.f32.mrf.mxu0
        %v1289 = vadd.f32 0.0, %v1288
        %1290 = vmatmul.f32.gmra.mxu0 %v1263
        %v1291 = vpop.f32.mrf.mxu0
        %v1292 = vadd.f32 0.0, %v1291
        %1293 = vmatmul.f32.gmra.mxu0 %v1266
        %v1294 = vpop.f32.mrf.mxu0
        %v1295 = vadd.f32 0.0, %v1294
        %1296 = vmatmul.f32.gmra.mxu0 %v1269
        %v1297 = vpop.f32.mrf.mxu0
        %v1298 = vadd.f32 0.0, %v1297
        %1299 = vdwg.mxu0
        %v1301 = vsel %vm425, %v1251, 0
        %v1304 = vsel %vm425, %v1252, 0
        %v1307 = vsel %vm425, %v1253, 0
        %v1310 = vsel %vm425, %v1254, 0
        %1312 = vmatpush.msra.mxu0 0.0
        %1313 = vmatpush.msra.mxu0 0.0
        %1314 = vmatpush.msra.mxu0 0.0
        %1315 = vmatpush.msra.mxu0 0.0
        %1316 = vmatpush.msra.mxu0 0.0
        %1317 = vmatpush.msra.mxu0 0.0
        %1318 = vmatpush.msra.mxu0 0.0
        %1319 = vmatpush.msra.mxu0 0.0
        %1320 = vmatpush.msra.mxu0 0.0
        %1321 = vmatpush.msra.mxu0 0.0
        %1322 = vmatpush.msra.mxu0 0.0
        %1323 = vmatpush.msra.mxu0 0.0
        %1324 = vmatpush.msra.mxu0 0.0
        %1325 = vmatpush.msra.mxu0 0.0
        %1326 = vmatpush.msra.mxu0 0.0
        %1327 = vmatpush.msra.mxu0 %v1239
        %1328 = vmatmul.f32.gmra.mxu0 %v1301
        %v1329 = vpop.f32.mrf.mxu0
        %v1330 = vadd.f32 %v1289, %v1329
        %1331 = vmatmul.f32.gmra.mxu0 %v1304
        %v1332 = vpop.f32.mrf.mxu0
        %v1333 = vadd.f32 %v1292, %v1332
        %1334 = vmatmul.f32.gmra.mxu0 %v1307
        %v1335 = vpop.f32.mrf.mxu0
        %v1336 = vadd.f32 %v1295, %v1335
        %1337 = vmatmul.f32.gmra.mxu0 %v1310
        %v1338 = vpop.f32.mrf.mxu0
        %v1339 = vadd.f32 %v1298, %v1338
        %1340 = vdwg.mxu0
        %v1342 = vsel %vm425, %v1255, 0
        %v1345 = vsel %vm425, %v1256, 0
        %v1348 = vsel %vm425, %v1257, 0
        %v1351 = vsel %vm425, %v1258, 0
        %1353 = vmatpush.msra.mxu0 0.0
        %1354 = vmatpush.msra.mxu0 0.0
        %1355 = vmatpush.msra.mxu0 0.0
        %1356 = vmatpush.msra.mxu0 0.0
        %1357 = vmatpush.msra.mxu0 0.0
        %1358 = vmatpush.msra.mxu0 0.0
        %1359 = vmatpush.msra.mxu0 0.0
        %1360 = vmatpush.msra.mxu0 0.0
        %1361 = vmatpush.msra.mxu0 0.0
        %1362 = vmatpush.msra.mxu0 0.0
        %1363 = vmatpush.msra.mxu0 0.0
        %1364 = vmatpush.msra.mxu0 0.0
        %1365 = vmatpush.msra.mxu0 0.0
        %1366 = vmatpush.msra.mxu0 0.0
        %1367 = vmatpush.msra.mxu0 0.0
        %1368 = vmatpush.msra.mxu0 %v1241
        %1369 = vmatmul.f32.gmra.mxu0 %v1342
        %v1370 = vpop.f32.mrf.mxu0
        %v1371 = vadd.f32 0.0, %v1370
        %1372 = vmatmul.f32.gmra.mxu0 %v1345
        %v1373 = vpop.f32.mrf.mxu0
        %v1374 = vadd.f32 0.0, %v1373
        %1375 = vmatmul.f32.gmra.mxu0 %v1348
        %v1376 = vpop.f32.mrf.mxu0
        %v1377 = vadd.f32 0.0, %v1376
        %1378 = vmatmul.f32.gmra.mxu0 %v1351
        %v1379 = vpop.f32.mrf.mxu0
        %v1380 = vadd.f32 0.0, %v1379
        %1381 = vdwg.mxu0
        %v1382 = vadd.f32 %v1330, %v1371
        %v1383 = vadd.f32 %v1333, %v1374
        %v1384 = vadd.f32 %v1336, %v1377
        %v1385 = vadd.f32 %v1339, %v1380
        %v1387 = vperm.slane %v1250, 0
        %v1389 = vadd.f32 %v1382, %v1387
        %v1390 = vadd.f32 %v1383, %v1387
        %v1391 = vadd.f32 %v1384, %v1387
        %v1392 = vadd.f32 %v1385, %v1387
        %s1393 = scalar_lea.vmem %s6, 2
        %v1394 = vld [vmem:[%s1393] sm:$0x1]
        %v1395 = vld [vmem:[#allocation2 + $0x4] sm:$0xff]
        %v1396 = vld [vmem:[#allocation2 + $0xc] sm:$0xff]
        %v1397 = vld [vmem:[#allocation2 + $0x14] sm:$0xff]
        %v1398 = vld [vmem:[#allocation2 + $0x1c] sm:$0xff]
        %v1399 = vld [vmem:[#allocation2 + $0x24] sm:$0xff]
        %1400 = vmatpush.msra.mxu0 0.0
        %1401 = vmatpush.msra.mxu0 0.0
        %1402 = vmatpush.msra.mxu0 0.0
        %1403 = vmatpush.msra.mxu0 0.0
        %1404 = vmatpush.msra.mxu0 0.0
        %1405 = vmatpush.msra.mxu0 0.0
        %1406 = vmatpush.msra.mxu0 0.0
        %1407 = vmatpush.msra.mxu0 0.0
        %1408 = vmatpush.msra.mxu0 0.0
        %1409 = vmatpush.msra.mxu0 0.0
        %1410 = vmatpush.msra.mxu0 0.0
        %1411 = vmatpush.msra.mxu0 0.0
        %1412 = vmatpush.msra.mxu0 0.0
        %1413 = vmatpush.msra.mxu0 0.0
        %1414 = vmatpush.msra.mxu0 0.0
        %1415 = vmatpush.msra.mxu0 %v1244
        %1416 = vmatmul.f32.gmra.mxu0 %v1260
        %v1417 = vpop.f32.mrf.mxu0
        %v1418 = vadd.f32 0.0, %v1417
        %1419 = vmatmul.f32.gmra.mxu0 %v1263
        %v1420 = vpop.f32.mrf.mxu0
        %v1421 = vadd.f32 0.0, %v1420
        %1422 = vmatmul.f32.gmra.mxu0 %v1266
        %v1423 = vpop.f32.mrf.mxu0
        %v1424 = vadd.f32 0.0, %v1423
        %1425 = vmatmul.f32.gmra.mxu0 %v1269
        %v1426 = vpop.f32.mrf.mxu0
        %v1427 = vadd.f32 0.0, %v1426
        %1428 = vdwg.mxu0
        %v1430 = vsel %vm425, %v1395, 0
        %v1433 = vsel %vm425, %v1396, 0
        %v1436 = vsel %vm425, %v1397, 0
        %v1439 = vsel %vm425, %v1398, 0
        %1441 = vmatpush.msra.mxu0 0.0
        %1442 = vmatpush.msra.mxu0 0.0
        %1443 = vmatpush.msra.mxu0 0.0
        %1444 = vmatpush.msra.mxu0 0.0
        %1445 = vmatpush.msra.mxu0 0.0
        %1446 = vmatpush.msra.mxu0 0.0
        %1447 = vmatpush.msra.mxu0 0.0
        %1448 = vmatpush.msra.mxu0 0.0
        %1449 = vmatpush.msra.mxu0 0.0
        %1450 = vmatpush.msra.mxu0 0.0
        %1451 = vmatpush.msra.mxu0 0.0
        %1452 = vmatpush.msra.mxu0 0.0
        %1453 = vmatpush.msra.mxu0 0.0
        %1454 = vmatpush.msra.mxu0 0.0
        %1455 = vmatpush.msra.mxu0 0.0
        %1456 = vmatpush.msra.mxu0 %v1243
        %1457 = vmatmul.f32.gmra.mxu0 %v1430
        %v1458 = vpop.f32.mrf.mxu0
        %v1459 = vadd.f32 %v1418, %v1458
        %1460 = vmatmul.f32.gmra.mxu0 %v1433
        %v1461 = vpop.f32.mrf.mxu0
        %v1462 = vadd.f32 %v1421, %v1461
        %1463 = vmatmul.f32.gmra.mxu0 %v1436
        %v1464 = vpop.f32.mrf.mxu0
        %v1465 = vadd.f32 %v1424, %v1464
        %1466 = vmatmul.f32.gmra.mxu0 %v1439
        %v1467 = vpop.f32.mrf.mxu0
        %v1468 = vadd.f32 %v1427, %v1467
        %1469 = vdwg.mxu0
        %v1471 = vsel %vm425, %v1399, 0
        %1473 = vmatpush.msra.mxu0 0.0
        %1474 = vmatpush.msra.mxu0 0.0
        %1475 = vmatpush.msra.mxu0 0.0
        %1476 = vmatpush.msra.mxu0 0.0
        %1477 = vmatpush.msra.mxu0 0.0
        %1478 = vmatpush.msra.mxu0 0.0
        %1479 = vmatpush.msra.mxu0 0.0
        %1480 = vmatpush.msra.mxu0 0.0
        %1481 = vmatpush.msra.mxu0 0.0
        %1482 = vmatpush.msra.mxu0 0.0
        %1483 = vmatpush.msra.mxu0 0.0
        %1484 = vmatpush.msra.mxu0 0.0
        %1485 = vmatpush.msra.mxu0 0.0
        %1486 = vmatpush.msra.mxu0 0.0
        %1487 = vmatpush.msra.mxu0 0.0
        %1488 = vmatpush.msra.mxu0 %v1245
        %1489 = vmatmul.f32.gmra.mxu0 %v1433
        %v1490 = vpop.f32.mrf.mxu0
        %v1491 = vadd.f32 0.0, %v1490
        %1492 = vmatmul.f32.gmra.mxu0 %v1436
        %v1493 = vpop.f32.mrf.mxu0
        %v1494 = vadd.f32 0.0, %v1493
        %1495 = vmatmul.f32.gmra.mxu0 %v1439
        %v1496 = vpop.f32.mrf.mxu0
        %v1497 = vadd.f32 0.0, %v1496
        %1498 = vmatmul.f32.gmra.mxu0 %v1471
        %v1499 = vpop.f32.mrf.mxu0
        %v1500 = vadd.f32 0.0, %v1499
        %1501 = vdwg.mxu0
        %v1502 = vadd.f32 %v1459, %v1491
        %v1503 = vadd.f32 %v1462, %v1494
        %v1504 = vadd.f32 %v1465, %v1497
        %v1505 = vadd.f32 %v1468, %v1500
        %v1507 = vperm.slane %v1394, 0
        %v1509 = vadd.f32 %v1502, %v1507
        %v1510 = vadd.f32 %v1503, %v1507
        %v1511 = vadd.f32 %v1504, %v1507
        %v1512 = vadd.f32 %v1505, %v1507
        %v1514 = vsel %vm425, %v1509, 0
        %v1517 = vsel %vm425, %v1510, 0
        %v1520 = vsel %vm425, %v1511, 0
        %v1523 = vsel %vm425, %v1512, 0
        %1525 = vmatpush.msra.mxu0 0.0
        %1526 = vmatpush.msra.mxu0 0.0
        %1527 = vmatpush.msra.mxu0 0.0
        %1528 = vmatpush.msra.mxu0 0.0
        %1529 = vmatpush.msra.mxu0 0.0
        %1530 = vmatpush.msra.mxu0 0.0
        %1531 = vmatpush.msra.mxu0 0.0
        %1532 = vmatpush.msra.mxu0 0.0
        %1533 = vmatpush.msra.mxu0 0.0
        %1534 = vmatpush.msra.mxu0 0.0
        %1535 = vmatpush.msra.mxu0 0.0
        %1536 = vmatpush.msra.mxu0 0.0
        %1537 = vmatpush.msra.mxu0 0.0
        %1538 = vmatpush.msra.mxu0 0.0
        %1539 = vmatpush.msra.mxu0 0.0
        %1540 = vmatpush.msra.mxu0 %v1248
        %1541 = vmatmul.f32.gmra.mxu0 %v1514
        %v1542 = vpop.f32.mrf.mxu0
        %v1543 = vadd.f32 0.0, %v1542
        %1544 = vmatmul.f32.gmra.mxu0 %v1517
        %v1545 = vpop.f32.mrf.mxu0
        %v1546 = vadd.f32 0.0, %v1545
        %1547 = vmatmul.f32.gmra.mxu0 %v1520
        %v1548 = vpop.f32.mrf.mxu0
        %v1549 = vadd.f32 0.0, %v1548
        %1550 = vmatmul.f32.gmra.mxu0 %v1523
        %v1551 = vpop.f32.mrf.mxu0
        %v1552 = vadd.f32 0.0, %v1551
        %1553 = vdwg.mxu0
        %v1555 = vsel %vm425, %v1389, 0
        %v1558 = vsel %vm425, %v1390, 0
        %v1561 = vsel %vm425, %v1391, 0
        %v1564 = vsel %vm425, %v1392, 0
        %1566 = vmatpush.msra.mxu0 0.0
        %1567 = vmatpush.msra.mxu0 0.0
        %1568 = vmatpush.msra.mxu0 0.0
        %1569 = vmatpush.msra.mxu0 0.0
        %1570 = vmatpush.msra.mxu0 0.0
        %1571 = vmatpush.msra.mxu0 0.0
        %1572 = vmatpush.msra.mxu0 0.0
        %1573 = vmatpush.msra.mxu0 0.0
        %1574 = vmatpush.msra.mxu0 0.0
        %1575 = vmatpush.msra.mxu0 0.0
        %1576 = vmatpush.msra.mxu0 0.0
        %1577 = vmatpush.msra.mxu0 0.0
        %1578 = vmatpush.msra.mxu0 0.0
        %1579 = vmatpush.msra.mxu0 0.0
        %1580 = vmatpush.msra.mxu0 0.0
        %1581 = vmatpush.msra.mxu0 %v1247
        %1582 = vmatmul.f32.gmra.mxu0 %v1555
        %v1583 = vpop.f32.mrf.mxu0
        %v1584 = vadd.f32 %v1543, %v1583
        %1585 = vmatmul.f32.gmra.mxu0 %v1558
        %v1586 = vpop.f32.mrf.mxu0
        %v1587 = vadd.f32 %v1546, %v1586
        %1588 = vmatmul.f32.gmra.mxu0 %v1561
        %v1589 = vpop.f32.mrf.mxu0
        %v1590 = vadd.f32 %v1549, %v1589
        %1591 = vmatmul.f32.gmra.mxu0 %v1564
        %v1592 = vpop.f32.mrf.mxu0
        %v1593 = vadd.f32 %v1552, %v1592
        %1594 = vdwg.mxu0
        %s1595 = scalar_lea.vmem %s8, 2
        %v1596 = vld [vmem:[%s1595] sm:$0x1]
        %v1598 = vperm.slane %v1596, 0
        %v1600 = vadd.f32 %v1584, %v1598
        %v1601 = vadd.f32 %v1587, %v1598
        %v1602 = vadd.f32 %v1590, %v1598
        %v1603 = vadd.f32 %v1593, %v1598
        %v1604 = vmax.f32 %v1600, 0.0
        %v1605 = vmax.f32 %v1601, 0.0
        %v1606 = vmax.f32 %v1602, 0.0
        %v1607 = vmax.f32 %v1603, 0.0
        %v1608 = vadd.f32 %v1230, %v1604
        %v1609 = vadd.f32 %v1231, %v1605
        %v1610 = vadd.f32 %v1232, %v1606
        %v1611 = vadd.f32 %v1233, %v1607
        %1612 = vst.msk [vmem:[#allocation2 + $0x8] sm:$0xff] %vm425, %v1608
        %1613 = vst.msk [vmem:[#allocation2 + $0x10] sm:$0xff] %vm425, %v1609
        %1614 = vst.msk [vmem:[#allocation2 + $0x18] sm:$0xff] %vm425, %v1610
        %1615 = vst.msk [vmem:[#allocation2 + $0x20] sm:$0xff] %vm425, %v1611
        %s1616 = scalar_lea.vmem %s3, 72
        %v1617 = vld [vmem:[%s1616] sm:$0xff]
        %v1618 = vld [vmem:[%s1616 + $0x8] sm:$0xff]
        %v1619 = vld [vmem:[%s1616 + $0x10] sm:$0xff]
        %s1620 = scalar_lea.vmem [#allocation3], 72
        %v1621 = vld [vmem:[%s1620] sm:$0xff]
        %v1622 = vld [vmem:[%s1620 + $0x8] sm:$0xff]
        %v1623 = vld [vmem:[%s1620 + $0x10] sm:$0xff]
        %s1624 = scalar_lea.vmem [#allocation5], 48
        %v1625 = vld [vmem:[%s1624] sm:$0xff]
        %v1626 = vld [vmem:[%s1624 + $0x8] sm:$0xff]
        %s1627 = scalar_lea.vmem %s4, 3
        %v1628 = vld [vmem:[%s1627] sm:$0x1]
        %v1629 = vld [vmem:[#allocation2 + $0x7] sm:$0xff]
        %v1630 = vld [vmem:[#allocation2 + $0xf] sm:$0xff]
        %v1631 = vld [vmem:[#allocation2 + $0x17] sm:$0xff]
        %v1632 = vld [vmem:[#allocation2 + $0x1f] sm:$0xff]
        %v1633 = vld [vmem:[#allocation2 + $0x9] sm:$0xff]
        %v1634 = vld [vmem:[#allocation2 + $0x11] sm:$0xff]
        %v1635 = vld [vmem:[#allocation2 + $0x19] sm:$0xff]
        %v1636 = vld [vmem:[#allocation2 + $0x21] sm:$0xff]
        %v1638 = vsel %vm425, %v1608, 0
        %v1641 = vsel %vm425, %v1609, 0
        %v1644 = vsel %vm425, %v1610, 0
        %v1647 = vsel %vm425, %v1611, 0
        %1649 = vmatpush.msra.mxu0 0.0
        %1650 = vmatpush.msra.mxu0 0.0
        %1651 = vmatpush.msra.mxu0 0.0
        %1652 = vmatpush.msra.mxu0 0.0
        %1653 = vmatpush.msra.mxu0 0.0
        %1654 = vmatpush.msra.mxu0 0.0
        %1655 = vmatpush.msra.mxu0 0.0
        %1656 = vmatpush.msra.mxu0 0.0
        %1657 = vmatpush.msra.mxu0 0.0
        %1658 = vmatpush.msra.mxu0 0.0
        %1659 = vmatpush.msra.mxu0 0.0
        %1660 = vmatpush.msra.mxu0 0.0
        %1661 = vmatpush.msra.mxu0 0.0
        %1662 = vmatpush.msra.mxu0 0.0
        %1663 = vmatpush.msra.mxu0 0.0
        %1664 = vmatpush.msra.mxu0 %v1618
        %1665 = vmatmul.f32.gmra.mxu0 %v1638
        %v1666 = vpop.f32.mrf.mxu0
        %v1667 = vadd.f32 0.0, %v1666
        %1668 = vmatmul.f32.gmra.mxu0 %v1641
        %v1669 = vpop.f32.mrf.mxu0
        %v1670 = vadd.f32 0.0, %v1669
        %1671 = vmatmul.f32.gmra.mxu0 %v1644
        %v1672 = vpop.f32.mrf.mxu0
        %v1673 = vadd.f32 0.0, %v1672
        %1674 = vmatmul.f32.gmra.mxu0 %v1647
        %v1675 = vpop.f32.mrf.mxu0
        %v1676 = vadd.f32 0.0, %v1675
        %1677 = vdwg.mxu0
        %v1679 = vsel %vm425, %v1629, 0
        %v1682 = vsel %vm425, %v1630, 0
        %v1685 = vsel %vm425, %v1631, 0
        %v1688 = vsel %vm425, %v1632, 0
        %1690 = vmatpush.msra.mxu0 0.0
        %1691 = vmatpush.msra.mxu0 0.0
        %1692 = vmatpush.msra.mxu0 0.0
        %1693 = vmatpush.msra.mxu0 0.0
        %1694 = vmatpush.msra.mxu0 0.0
        %1695 = vmatpush.msra.mxu0 0.0
        %1696 = vmatpush.msra.mxu0 0.0
        %1697 = vmatpush.msra.mxu0 0.0
        %1698 = vmatpush.msra.mxu0 0.0
        %1699 = vmatpush.msra.mxu0 0.0
        %1700 = vmatpush.msra.mxu0 0.0
        %1701 = vmatpush.msra.mxu0 0.0
        %1702 = vmatpush.msra.mxu0 0.0
        %1703 = vmatpush.msra.mxu0 0.0
        %1704 = vmatpush.msra.mxu0 0.0
        %1705 = vmatpush.msra.mxu0 %v1617
        %1706 = vmatmul.f32.gmra.mxu0 %v1679
        %v1707 = vpop.f32.mrf.mxu0
        %v1708 = vadd.f32 %v1667, %v1707
        %1709 = vmatmul.f32.gmra.mxu0 %v1682
        %v1710 = vpop.f32.mrf.mxu0
        %v1711 = vadd.f32 %v1670, %v1710
        %1712 = vmatmul.f32.gmra.mxu0 %v1685
        %v1713 = vpop.f32.mrf.mxu0
        %v1714 = vadd.f32 %v1673, %v1713
        %1715 = vmatmul.f32.gmra.mxu0 %v1688
        %v1716 = vpop.f32.mrf.mxu0
        %v1717 = vadd.f32 %v1676, %v1716
        %1718 = vdwg.mxu0
        %v1720 = vsel %vm425, %v1633, 0
        %v1723 = vsel %vm425, %v1634, 0
        %v1726 = vsel %vm425, %v1635, 0
        %v1729 = vsel %vm425, %v1636, 0
        %1731 = vmatpush.msra.mxu0 0.0
        %1732 = vmatpush.msra.mxu0 0.0
        %1733 = vmatpush.msra.mxu0 0.0
        %1734 = vmatpush.msra.mxu0 0.0
        %1735 = vmatpush.msra.mxu0 0.0
        %1736 = vmatpush.msra.mxu0 0.0
        %1737 = vmatpush.msra.mxu0 0.0
        %1738 = vmatpush.msra.mxu0 0.0
        %1739 = vmatpush.msra.mxu0 0.0
        %1740 = vmatpush.msra.mxu0 0.0
        %1741 = vmatpush.msra.mxu0 0.0
        %1742 = vmatpush.msra.mxu0 0.0
        %1743 = vmatpush.msra.mxu0 0.0
        %1744 = vmatpush.msra.mxu0 0.0
        %1745 = vmatpush.msra.mxu0 0.0
        %1746 = vmatpush.msra.mxu0 %v1619
        %1747 = vmatmul.f32.gmra.mxu0 %v1720
        %v1748 = vpop.f32.mrf.mxu0
        %v1749 = vadd.f32 0.0, %v1748
        %1750 = vmatmul.f32.gmra.mxu0 %v1723
        %v1751 = vpop.f32.mrf.mxu0
        %v1752 = vadd.f32 0.0, %v1751
        %1753 = vmatmul.f32.gmra.mxu0 %v1726
        %v1754 = vpop.f32.mrf.mxu0
        %v1755 = vadd.f32 0.0, %v1754
        %1756 = vmatmul.f32.gmra.mxu0 %v1729
        %v1757 = vpop.f32.mrf.mxu0
        %v1758 = vadd.f32 0.0, %v1757
        %1759 = vdwg.mxu0
        %v1760 = vadd.f32 %v1708, %v1749
        %v1761 = vadd.f32 %v1711, %v1752
        %v1762 = vadd.f32 %v1714, %v1755
        %v1763 = vadd.f32 %v1717, %v1758
        %v1765 = vperm.slane %v1628, 0
        %v1767 = vadd.f32 %v1760, %v1765
        %v1768 = vadd.f32 %v1761, %v1765
        %v1769 = vadd.f32 %v1762, %v1765
        %v1770 = vadd.f32 %v1763, %v1765
        %s1771 = scalar_lea.vmem %s6, 3
        %v1772 = vld [vmem:[%s1771] sm:$0x1]
        %v1773 = vld [vmem:[#allocation2] sm:$0xff]
        %v1774 = vld [vmem:[#allocation2 + $0x8] sm:$0xff]
        %v1775 = vld [vmem:[#allocation2 + $0x10] sm:$0xff]
        %v1776 = vld [vmem:[#allocation2 + $0x18] sm:$0xff]
        %v1777 = vld [vmem:[#allocation2 + $0x20] sm:$0xff]
        %v1778 = vld [vmem:[#allocation2 + $0x28] sm:$0xff]
        %1779 = vmatpush.msra.mxu0 0.0
        %1780 = vmatpush.msra.mxu0 0.0
        %1781 = vmatpush.msra.mxu0 0.0
        %1782 = vmatpush.msra.mxu0 0.0
        %1783 = vmatpush.msra.mxu0 0.0
        %1784 = vmatpush.msra.mxu0 0.0
        %1785 = vmatpush.msra.mxu0 0.0
        %1786 = vmatpush.msra.mxu0 0.0
        %1787 = vmatpush.msra.mxu0 0.0
        %1788 = vmatpush.msra.mxu0 0.0
        %1789 = vmatpush.msra.mxu0 0.0
        %1790 = vmatpush.msra.mxu0 0.0
        %1791 = vmatpush.msra.mxu0 0.0
        %1792 = vmatpush.msra.mxu0 0.0
        %1793 = vmatpush.msra.mxu0 0.0
        %1794 = vmatpush.msra.mxu0 %v1622
        %1795 = vmatmul.f32.gmra.mxu0 %v1638
        %v1796 = vpop.f32.mrf.mxu0
        %v1797 = vadd.f32 0.0, %v1796
        %1798 = vmatmul.f32.gmra.mxu0 %v1641
        %v1799 = vpop.f32.mrf.mxu0
        %v1800 = vadd.f32 0.0, %v1799
        %1801 = vmatmul.f32.gmra.mxu0 %v1644
        %v1802 = vpop.f32.mrf.mxu0
        %v1803 = vadd.f32 0.0, %v1802
        %1804 = vmatmul.f32.gmra.mxu0 %v1647
        %v1805 = vpop.f32.mrf.mxu0
        %v1806 = vadd.f32 0.0, %v1805
        %1807 = vdwg.mxu0
        %v1809 = vsel %vm425, %v1773, 0
        %v1812 = vsel %vm425, %v1774, 0
        %v1815 = vsel %vm425, %v1775, 0
        %v1818 = vsel %vm425, %v1776, 0
        %1820 = vmatpush.msra.mxu0 0.0
        %1821 = vmatpush.msra.mxu0 0.0
        %1822 = vmatpush.msra.mxu0 0.0
        %1823 = vmatpush.msra.mxu0 0.0
        %1824 = vmatpush.msra.mxu0 0.0
        %1825 = vmatpush.msra.mxu0 0.0
        %1826 = vmatpush.msra.mxu0 0.0
        %1827 = vmatpush.msra.mxu0 0.0
        %1828 = vmatpush.msra.mxu0 0.0
        %1829 = vmatpush.msra.mxu0 0.0
        %1830 = vmatpush.msra.mxu0 0.0
        %1831 = vmatpush.msra.mxu0 0.0
        %1832 = vmatpush.msra.mxu0 0.0
        %1833 = vmatpush.msra.mxu0 0.0
        %1834 = vmatpush.msra.mxu0 0.0
        %1835 = vmatpush.msra.mxu0 %v1621
        %1836 = vmatmul.f32.gmra.mxu0 %v1809
        %v1837 = vpop.f32.mrf.mxu0
        %v1838 = vadd.f32 %v1797, %v1837
        %1839 = vmatmul.f32.gmra.mxu0 %v1812
        %v1840 = vpop.f32.mrf.mxu0
        %v1841 = vadd.f32 %v1800, %v1840
        %1842 = vmatmul.f32.gmra.mxu0 %v1815
        %v1843 = vpop.f32.mrf.mxu0
        %v1844 = vadd.f32 %v1803, %v1843
        %1845 = vmatmul.f32.gmra.mxu0 %v1818
        %v1846 = vpop.f32.mrf.mxu0
        %v1847 = vadd.f32 %v1806, %v1846
        %1848 = vdwg.mxu0
        %v1850 = vsel %vm425, %v1777, 0
        %v1853 = vsel %vm425, %v1778, 0
        %1855 = vmatpush.msra.mxu0 0.0
        %1856 = vmatpush.msra.mxu0 0.0
        %1857 = vmatpush.msra.mxu0 0.0
        %1858 = vmatpush.msra.mxu0 0.0
        %1859 = vmatpush.msra.mxu0 0.0
        %1860 = vmatpush.msra.mxu0 0.0
        %1861 = vmatpush.msra.mxu0 0.0
        %1862 = vmatpush.msra.mxu0 0.0
        %1863 = vmatpush.msra.mxu0 0.0
        %1864 = vmatpush.msra.mxu0 0.0
        %1865 = vmatpush.msra.mxu0 0.0
        %1866 = vmatpush.msra.mxu0 0.0
        %1867 = vmatpush.msra.mxu0 0.0
        %1868 = vmatpush.msra.mxu0 0.0
        %1869 = vmatpush.msra.mxu0 0.0
        %1870 = vmatpush.msra.mxu0 %v1623
        %1871 = vmatmul.f32.gmra.mxu0 %v1815
        %v1872 = vpop.f32.mrf.mxu0
        %v1873 = vadd.f32 0.0, %v1872
        %1874 = vmatmul.f32.gmra.mxu0 %v1818
        %v1875 = vpop.f32.mrf.mxu0
        %v1876 = vadd.f32 0.0, %v1875
        %1877 = vmatmul.f32.gmra.mxu0 %v1850
        %v1878 = vpop.f32.mrf.mxu0
        %v1879 = vadd.f32 0.0, %v1878
        %1880 = vmatmul.f32.gmra.mxu0 %v1853
        %v1881 = vpop.f32.mrf.mxu0
        %v1882 = vadd.f32 0.0, %v1881
        %1883 = vdwg.mxu0
        %v1884 = vadd.f32 %v1838, %v1873
        %v1885 = vadd.f32 %v1841, %v1876
        %v1886 = vadd.f32 %v1844, %v1879
        %v1887 = vadd.f32 %v1847, %v1882
        %v1889 = vperm.slane %v1772, 0
        %v1891 = vadd.f32 %v1884, %v1889
        %v1892 = vadd.f32 %v1885, %v1889
        %v1893 = vadd.f32 %v1886, %v1889
        %v1894 = vadd.f32 %v1887, %v1889
        %v1896 = vsel %vm425, %v1891, 0
        %v1899 = vsel %vm425, %v1892, 0
        %v1902 = vsel %vm425, %v1893, 0
        %v1905 = vsel %vm425, %v1894, 0
        %1907 = vmatpush.msra.mxu0 0.0
        %1908 = vmatpush.msra.mxu0 0.0
        %1909 = vmatpush.msra.mxu0 0.0
        %1910 = vmatpush.msra.mxu0 0.0
        %1911 = vmatpush.msra.mxu0 0.0
        %1912 = vmatpush.msra.mxu0 0.0
        %1913 = vmatpush.msra.mxu0 0.0
        %1914 = vmatpush.msra.mxu0 0.0
        %1915 = vmatpush.msra.mxu0 0.0
        %1916 = vmatpush.msra.mxu0 0.0
        %1917 = vmatpush.msra.mxu0 0.0
        %1918 = vmatpush.msra.mxu0 0.0
        %1919 = vmatpush.msra.mxu0 0.0
        %1920 = vmatpush.msra.mxu0 0.0
        %1921 = vmatpush.msra.mxu0 0.0
        %1922 = vmatpush.msra.mxu0 %v1626
        %1923 = vmatmul.f32.gmra.mxu0 %v1896
        %v1924 = vpop.f32.mrf.mxu0
        %v1925 = vadd.f32 0.0, %v1924
        %1926 = vmatmul.f32.gmra.mxu0 %v1899
        %v1927 = vpop.f32.mrf.mxu0
        %v1928 = vadd.f32 0.0, %v1927
        %1929 = vmatmul.f32.gmra.mxu0 %v1902
        %v1930 = vpop.f32.mrf.mxu0
        %v1931 = vadd.f32 0.0, %v1930
        %1932 = vmatmul.f32.gmra.mxu0 %v1905
        %v1933 = vpop.f32.mrf.mxu0
        %v1934 = vadd.f32 0.0, %v1933
        %1935 = vdwg.mxu0
        %v1937 = vsel %vm425, %v1767, 0
        %v1940 = vsel %vm425, %v1768, 0
        %v1943 = vsel %vm425, %v1769, 0
        %v1946 = vsel %vm425, %v1770, 0
        %1948 = vmatpush.msra.mxu0 0.0
        %1949 = vmatpush.msra.mxu0 0.0
        %1950 = vmatpush.msra.mxu0 0.0
        %1951 = vmatpush.msra.mxu0 0.0
        %1952 = vmatpush.msra.mxu0 0.0
        %1953 = vmatpush.msra.mxu0 0.0
        %1954 = vmatpush.msra.mxu0 0.0
        %1955 = vmatpush.msra.mxu0 0.0
        %1956 = vmatpush.msra.mxu0 0.0
        %1957 = vmatpush.msra.mxu0 0.0
        %1958 = vmatpush.msra.mxu0 0.0
        %1959 = vmatpush.msra.mxu0 0.0
        %1960 = vmatpush.msra.mxu0 0.0
        %1961 = vmatpush.msra.mxu0 0.0
        %1962 = vmatpush.msra.mxu0 0.0
        %1963 = vmatpush.msra.mxu0 %v1625
        %1964 = vmatmul.f32.gmra.mxu0 %v1937
        %v1965 = vpop.f32.mrf.mxu0
        %v1966 = vadd.f32 %v1925, %v1965
        %1967 = vmatmul.f32.gmra.mxu0 %v1940
        %v1968 = vpop.f32.mrf.mxu0
        %v1969 = vadd.f32 %v1928, %v1968
        %1970 = vmatmul.f32.gmra.mxu0 %v1943
        %v1971 = vpop.f32.mrf.mxu0
        %v1972 = vadd.f32 %v1931, %v1971
        %1973 = vmatmul.f32.gmra.mxu0 %v1946
        %v1974 = vpop.f32.mrf.mxu0
        %v1975 = vadd.f32 %v1934, %v1974
        %1976 = vdwg.mxu0
        %s1977 = scalar_lea.vmem %s8, 3
        %v1978 = vld [vmem:[%s1977] sm:$0x1]
        %v1980 = vperm.slane %v1978, 0
        %v1982 = vadd.f32 %v1966, %v1980
        %v1983 = vadd.f32 %v1969, %v1980
        %v1984 = vadd.f32 %v1972, %v1980
        %v1985 = vadd.f32 %v1975, %v1980
        %v1986 = vmax.f32 %v1982, 0.0
        %v1987 = vmax.f32 %v1983, 0.0
        %v1988 = vmax.f32 %v1984, 0.0
        %v1989 = vmax.f32 %v1985, 0.0
        %v1990 = vadd.f32 %v1608, %v1986
        %v1991 = vadd.f32 %v1609, %v1987
        %v1992 = vadd.f32 %v1610, %v1988
        %v1993 = vadd.f32 %v1611, %v1989
        %v1994 = vld [vmem:[%s9] sm:$0xff]
        %v1995 = vld [vmem:[%s10] sm:$0x1]
        %v1997 = vperm.slane %v1995, 0
        %v2000 = vsel %vm425, %v1990, 0
        %v2003 = vsel %vm425, %v1991, 0
        %v2006 = vsel %vm425, %v1992, 0
        %v2009 = vsel %vm425, %v1993, 0
        %2011 = vmatpush.msra.mxu0 0.0
        %2012 = vmatpush.msra.mxu0 0.0
        %2013 = vmatpush.msra.mxu0 0.0
        %2014 = vmatpush.msra.mxu0 0.0
        %2015 = vmatpush.msra.mxu0 0.0
        %2016 = vmatpush.msra.mxu0 0.0
        %2017 = vmatpush.msra.mxu0 0.0
        %2018 = vmatpush.msra.mxu0 0.0
        %2019 = vmatpush.msra.mxu0 0.0
        %2020 = vmatpush.msra.mxu0 0.0
        %2021 = vmatpush.msra.mxu0 0.0
        %2022 = vmatpush.msra.mxu0 0.0
        %2023 = vmatpush.msra.mxu0 0.0
        %2024 = vmatpush.msra.mxu0 0.0
        %2025 = vmatpush.msra.mxu0 0.0
        %2026 = vmatpush.msra.mxu0 %v1994
        %2027 = vmatmul.f32.gmra.mxu0 %v2000
        %v2028 = vpop.f32.mrf.mxu0
        %v2029 = vadd.f32 %v1997, %v2028
        %2030 = vmatmul.f32.gmra.mxu0 %v2003
        %v2031 = vpop.f32.mrf.mxu0
        %v2032 = vadd.f32 %v1997, %v2031
        %2033 = vmatmul.f32.gmra.mxu0 %v2006
        %v2034 = vpop.f32.mrf.mxu0
        %v2035 = vadd.f32 %v1997, %v2034
        %2036 = vmatmul.f32.gmra.mxu0 %v2009
        %v2037 = vpop.f32.mrf.mxu0
        %v2038 = vadd.f32 %v1997, %v2037
        %2039 = vdwg.mxu0
        %2040 = vst.msk [vmem:[%s420] sm:$0xff] %vm425, %v2029
        %2041 = vst.msk [vmem:[%s420 + $0x8] sm:$0xff] %vm425, %v2032
        %2042 = vst.msk [vmem:[%s420 + $0x10] sm:$0xff] %vm425, %v2035
        %2043 = vst.msk [vmem:[%s420 + $0x18] sm:$0xff] %vm425, %v2038
        %p2044 = scmp.lt.s32.totalorder %s24, 1
        %s2045 = scalar_select %p2044, %s24, 1
        %s2046 = smul.addr %s2045, 4
        %s2047 = smul.addr %s2046, 8
        %s2048 = scalar_lea.vmem %s11, %s2047
        // Predicated region
        $region73: #{tpu_custom_call.1} parent=63 // pred_check
          %p2049 = pneg %p278
        $region74: #{tpu_custom_call.1} parent=63 // pred_check_branch
          %2051 = sbr.rel (%p2049) target = $region76
        $region75: #{tpu_custom_call.1} parent=63 // pred_region
          _
        $region76: #{tpu_custom_call.1} parent=63 // pred_fallthru
          _
      $region64: #{tpu_custom_call.1} parent=5 // pred_fallthru
        _
      %p2052 = scmp.le.s32.totalorder 2, %s19
      // Predicated region
      $region77: #{tpu_custom_call.1} parent=5 // pred_check
        %p2053 = pneg %p2052
      $region78: #{tpu_custom_call.1} parent=5 // pred_check_branch
        %2055 = sbr.rel (%p2053) target = $region80
      $region79: #{tpu_custom_call.1} parent=5 // pred_region
        %s2056 = ssub.s32 %s19, 2
        // Predicated region
        $region81: #{tpu_custom_call.1} parent=79 // pred_check
          %p2057 = pneg %p284
        $region82: #{tpu_custom_call.1} parent=79 // pred_check_branch
          %2059 = sbr.rel (%p2057) target = $region84
        $region83: #{tpu_custom_call.1} parent=79 // pred_region
          %p2060 = scmp.lt.s32.totalorder %s25, 1
          %s2061 = scalar_select %p2060, %s25, 1
          %s2062 = smul.addr %s2061, 4
          %s2063 = smul.addr %s2062, 8
          %s2064 = scalar_lea.vmem %s11, %s2063
        $region84: #{tpu_custom_call.1} parent=79 // pred_fallthru
          _
      $region80: #{tpu_custom_call.1} parent=5 // pred_fallthru
        _
    $region6: #{tpu_custom_call.1} parent=1 // loop_footer
      %s23 = sadd.s32 1, %s19
    $region7: #{tpu_custom_call.1} parent=1 // loop_footer_branch
      %18 = sbr.rel target = $region3
    $region8: #{tpu_custom_call.1} parent=1 // loop_exit
      _
    %2065 = vsyncpa [#allocation4], 1
    %s2066 = scalar_lea.sflag [#allocation4], 1
    %2067 = vsyncpa %s2066, 1
    %2068 = vsyncpa [#allocation6], 1

</llo_original>
